<compile_context>
chip_gen: v7x
topology: tpu7x:2x2x1
jax: 0.10.0
libtpu: 0.0.40
codegen_flags: <defaults>
</compile_context>

<pallas_src>
import functools
import math

import jax
import jax.numpy as jnp
from jax.experimental import pallas as pl
from jax.experimental.pallas import tpu as pltpu

# tcases[0] = [1, 96, 96, 55, 27, 3, 2, 0, 1]
KERNEL_SIZE = 3
STRIDE = 2
PADDING = 0
DILATION = 1


def _pad_value(dtype):
    """MaxPool padding identity: -inf for floats, dtype-min for ints."""
    dtype = jnp.dtype(dtype)
    if jnp.issubdtype(dtype, jnp.floating):
        return dtype.type(-jnp.inf)
    return jnp.iinfo(dtype).min


def _maxpool_kernel(*refs, ksize, stride, dilation, ho, wo):
    """refs = (phase_ref_0, ..., phase_ref_{s*s-1}, o_ref).

    Phase (ph, pw) holds x_nhwc[ph::s, pw::s, :] for one image, so every tap
    of the pooling window is an aligned (or +1-offset) slice of a phase block.
    """
    phase_refs, o_ref = refs[:-1], refs[-1]

    # Column taps grouped by column-phase: pw -> list of in-phase offsets ww.
    # (static Python bookkeeping, free at trace time)
    taps_by_pw = {}
    for kw in range(ksize):
        rw = kw * dilation
        taps_by_pw.setdefault(rw % stride, []).append(rw // stride)

    acc = None
    for kh in range(ksize):
        rh = kh * dilation
        ph, hh = rh % stride, rh // stride          # row phase / in-phase row
        for pw, wws in taps_by_pw.items():
            # One full-width slab load per (kh, pw) pair: 6 loads for the
            # 3x3/stride-2 case instead of 9 per-tap loads.
            slab = phase_refs[ph * stride + pw][pl.ds(hh, ho), :, :]
            for ww in sorted(set(wws)):
                # ww == 0: start-aligned; ww > 0: offset slice of the loaded
                # slab (sublane realign on the XLU), no extra VMEM load.
                tap = slab[:, ww:ww + wo, :]
                acc = tap if acc is None else jnp.maximum(acc, tap)
    o_ref[...] = acc                                # one big store per image


@functools.partial(jax.jit, static_argnums=(1, 2, 3, 4))
def maxpool2d(x_nchw, ksize=KERNEL_SIZE, stride=STRIDE, padding=PADDING,
              dilation=DILATION):
    """Matches torch.nn.MaxPool2d(ksize, stride, padding, dilation) on NCHW."""
    n, c, h, w = x_nchw.shape
    ho = (h + 2 * padding - dilation * (ksize - 1) - 1) // stride + 1
    wo = (w + 2 * padding - dilation * (ksize - 1) - 1) // stride + 1
    assert ho > 0 and wo > 0

    # NCHW -> NHWC so channels land on the 128-lane axis inside the kernel.
    x = jnp.transpose(x_nchw, (0, 2, 3, 1))
    if padding > 0:  # not hit for tcases[0] (padding=0)
        x = jnp.pad(
            x, ((0, 0), (padding, padding), (padding, padding), (0, 0)),
            constant_values=_pad_value(x_nchw.dtype))

    # Polyphase views (no concatenate, no alignment pad): phase (ph, pw) is
    # x[:, ph::s, pw::s, :], passed as a separate pallas input.
    if stride > 1:
        phases = [x[:, ph::stride, pw::stride, :]
                  for ph in range(stride) for pw in range(stride)]
    else:
        phases = [x]

    # Trace-time insurance (review correctness note): every (kh, kw) tap must
    # stay inside its phase block.
    for kh in range(ksize):
        rh = kh * dilation
        ph, hh = rh % stride, rh // stride
        for kw in range(ksize):
            rw = kw * dilation
            pw, ww = rw % stride, rw // stride
            p = phases[ph * stride + pw]
            assert hh + ho <= p.shape[1] and ww + wo <= p.shape[2], (kh, kw)

    kern = functools.partial(_maxpool_kernel, ksize=ksize, stride=stride,
                             dilation=dilation, ho=ho, wo=wo)

    itemsize = jnp.dtype(x_nchw.dtype).itemsize
    bytes_accessed = (sum(math.prod(p.shape) for p in phases)
                      + n * ho * wo * c) * itemsize
    cost = pl.CostEstimate(flops=n * ho * wo * c * (ksize * ksize - 1),
                           transcendentals=0,
                           bytes_accessed=bytes_accessed)

    out_nhwc = pl.pallas_call(
        kern,
        out_shape=jax.ShapeDtypeStruct((n, ho, wo, c), x_nchw.dtype),
        grid_spec=pltpu.PrefetchScalarGridSpec(
            num_scalar_prefetch=0,
            grid=(n,),                               # one step per image
            in_specs=[pl.BlockSpec((None,) + p.shape[1:],
                                   lambda b: (b, 0, 0, 0))
                      for p in phases],
            out_specs=pl.BlockSpec((None, ho, wo, c),
                                   lambda b: (b, 0, 0, 0)),
        ),
        compiler_params=pltpu.CompilerParams(
            dimension_semantics=("parallel",)),
        cost_estimate=cost,
    )(*phases)

    # TODO(synk): drop this transpose if the consumer accepts NHWC directly.
    return jnp.transpose(out_nhwc, (0, 3, 1, 2))    # back to NCHW


if __name__ == "__main__":
    # Input shape implied by the module's tcases[0] (NCHW): (1, 96, 55, 55).
    key = jax.random.PRNGKey(0)
    x = jax.random.normal(key, (1, 96, 55, 55), dtype=jnp.float32)

    y = jax.block_until_ready(
        maxpool2d(x, KERNEL_SIZE, STRIDE, PADDING, DILATION))

    # Pure-JAX reference with identical semantics (dilation=1, padding=0).
    ref = jax.lax.reduce_window(
        x, -jnp.inf, jax.lax.max,
        window_dimensions=(1, 1, KERNEL_SIZE, KERNEL_SIZE),
        window_strides=(1, 1, STRIDE, STRIDE),
        padding="VALID")

    assert y.shape == (1, 96, 27, 27), y.shape
    assert jnp.allclose(y, ref), "Pallas maxpool mismatch vs reference"
    print("KERNEL_OK")
</pallas_src>

<mosaic_0001>
module attributes {stable_mosaic.version = 11 : i64} {
  func.func @_maxpool_kernel(%arg0: i32, %arg1: memref<1x28x28x96xf32, #tpu.memory_space<vmem>>, %arg2: memref<1x28x27x96xf32, #tpu.memory_space<vmem>>, %arg3: memref<1x27x28x96xf32, #tpu.memory_space<vmem>>, %arg4: memref<1x27x27x96xf32, #tpu.memory_space<vmem>>, %arg5: memref<1x27x27x96xf32, #tpu.memory_space<vmem>>) attributes {dimension_semantics = [#tpu.dimension_semantics<parallel>], iteration_bounds = array<i64: 1>, scalar_prefetch = 0 : i64, scratch_operands = 0 : i64, tpu.core_type = #tpu.core_type<tc>, window_params = [{transform_indices = @transform_0, window_bounds = array<i64: 1, 28, 28, 96>}, {transform_indices = @transform_1, window_bounds = array<i64: 1, 28, 27, 96>}, {transform_indices = @transform_2, window_bounds = array<i64: 1, 27, 28, 96>}, {transform_indices = @transform_3, window_bounds = array<i64: 1, 27, 27, 96>}, {transform_indices = @transform_4, window_bounds = array<i64: 1, 27, 27, 96>}]} {
    %c0 = arith.constant 0 : index
    %c0_0 = arith.constant 0 : index
    %c0_1 = arith.constant 0 : index
    %c0_2 = arith.constant 0 : index
    %0 = vector.load %arg1[%c0, %c0_0, %c0_1, %c0_2] : memref<1x28x28x96xf32, #tpu.memory_space<vmem>>, vector<1x27x28x96xf32>
    %1 = vector.shape_cast %0 : vector<1x27x28x96xf32> to vector<27x28x96xf32>
    %2 = vector.extract_strided_slice %1 {offsets = [0, 0, 0], sizes = [27, 27, 96], strides = [1, 1, 1]} : vector<27x28x96xf32> to vector<27x27x96xf32>
    %3 = vector.extract_strided_slice %1 {offsets = [0, 1, 0], sizes = [27, 27, 96], strides = [1, 1, 1]} : vector<27x28x96xf32> to vector<27x27x96xf32>
    %4 = arith.maximumf %2, %3 : vector<27x27x96xf32>
    %c0_3 = arith.constant 0 : index
    %c0_4 = arith.constant 0 : index
    %c0_5 = arith.constant 0 : index
    %c0_6 = arith.constant 0 : index
    %5 = vector.load %arg2[%c0_3, %c0_4, %c0_5, %c0_6] : memref<1x28x27x96xf32, #tpu.memory_space<vmem>>, vector<1x27x27x96xf32>
    %6 = vector.shape_cast %5 : vector<1x27x27x96xf32> to vector<27x27x96xf32>
    %7 = arith.maximumf %4, %6 : vector<27x27x96xf32>
    %c0_7 = arith.constant 0 : index
    %c0_8 = arith.constant 0 : index
    %c0_9 = arith.constant 0 : index
    %c0_10 = arith.constant 0 : index
    %8 = vector.load %arg3[%c0_7, %c0_8, %c0_9, %c0_10] : memref<1x27x28x96xf32, #tpu.memory_space<vmem>>, vector<1x27x28x96xf32>
    %9 = vector.shape_cast %8 : vector<1x27x28x96xf32> to vector<27x28x96xf32>
    %10 = vector.extract_strided_slice %9 {offsets = [0, 0, 0], sizes = [27, 27, 96], strides = [1, 1, 1]} : vector<27x28x96xf32> to vector<27x27x96xf32>
    %11 = arith.maximumf %7, %10 : vector<27x27x96xf32>
    %12 = vector.extract_strided_slice %9 {offsets = [0, 1, 0], sizes = [27, 27, 96], strides = [1, 1, 1]} : vector<27x28x96xf32> to vector<27x27x96xf32>
    %13 = arith.maximumf %11, %12 : vector<27x27x96xf32>
    %c0_11 = arith.constant 0 : index
    %c0_12 = arith.constant 0 : index
    %c0_13 = arith.constant 0 : index
    %c0_14 = arith.constant 0 : index
    %14 = vector.load %arg4[%c0_11, %c0_12, %c0_13, %c0_14] : memref<1x27x27x96xf32, #tpu.memory_space<vmem>>, vector<1x27x27x96xf32>
    %15 = vector.shape_cast %14 : vector<1x27x27x96xf32> to vector<27x27x96xf32>
    %16 = arith.maximumf %13, %15 : vector<27x27x96xf32>
    %c0_15 = arith.constant 0 : index
    %c1 = arith.constant 1 : index
    %c0_16 = arith.constant 0 : index
    %c0_17 = arith.constant 0 : index
    %17 = vector.load %arg1[%c0_15, %c1, %c0_16, %c0_17] : memref<1x28x28x96xf32, #tpu.memory_space<vmem>>, vector<1x27x28x96xf32>
    %18 = vector.shape_cast %17 : vector<1x27x28x96xf32> to vector<27x28x96xf32>
    %19 = vector.extract_strided_slice %18 {offsets = [0, 0, 0], sizes = [27, 27, 96], strides = [1, 1, 1]} : vector<27x28x96xf32> to vector<27x27x96xf32>
    %20 = arith.maximumf %16, %19 : vector<27x27x96xf32>
    %21 = vector.extract_strided_slice %18 {offsets = [0, 1, 0], sizes = [27, 27, 96], strides = [1, 1, 1]} : vector<27x28x96xf32> to vector<27x27x96xf32>
    %22 = arith.maximumf %20, %21 : vector<27x27x96xf32>
    %c0_18 = arith.constant 0 : index
    %c1_19 = arith.constant 1 : index
    %c0_20 = arith.constant 0 : index
    %c0_21 = arith.constant 0 : index
    %23 = vector.load %arg2[%c0_18, %c1_19, %c0_20, %c0_21] : memref<1x28x27x96xf32, #tpu.memory_space<vmem>>, vector<1x27x27x96xf32>
    %24 = vector.shape_cast %23 : vector<1x27x27x96xf32> to vector<27x27x96xf32>
    %25 = arith.maximumf %22, %24 : vector<27x27x96xf32>
    %c0_22 = arith.constant 0 : index
    %c0_23 = arith.constant 0 : index
    %c0_24 = arith.constant 0 : index
    %c0_25 = arith.constant 0 : index
    %26 = vector.load %arg5[%c0_22, %c0_23, %c0_24, %c0_25] : memref<1x27x27x96xf32, #tpu.memory_space<vmem>>, vector<1x27x27x96xf32>
    %27 = vector.shape_cast %26 : vector<1x27x27x96xf32> to vector<27x27x96xf32>
    %28 = vector.shape_cast %25 : vector<27x27x96xf32> to vector<1x27x27x96xf32>
    tpu.vector_store %arg5[%c0_22, %c0_23, %c0_24, %c0_25], %28 {strides = array<i32>} : memref<1x27x27x96xf32, #tpu.memory_space<vmem>>, vector<1x27x27x96xf32>,
    return
  }
  func.func @transform_0(%arg0: i32) -> (i32, i32, i32, i32) {
    %c0_i32 = arith.constant 0 : i32
    %c0_i32_0 = arith.constant 0 : i32
    %c0_i32_1 = arith.constant 0 : i32
    %c0_i32_2 = arith.constant 0 : i32
    return %arg0, %c0_i32, %c0_i32_0, %c0_i32_1 : i32, i32, i32, i32
  }
  func.func @transform_1(%arg0: i32) -> (i32, i32, i32, i32) {
    %c0_i32 = arith.constant 0 : i32
    %c0_i32_0 = arith.constant 0 : i32
    %c0_i32_1 = arith.constant 0 : i32
    %c0_i32_2 = arith.constant 0 : i32
    return %arg0, %c0_i32, %c0_i32_0, %c0_i32_1 : i32, i32, i32, i32
  }
  func.func @transform_2(%arg0: i32) -> (i32, i32, i32, i32) {
    %c0_i32 = arith.constant 0 : i32
    %c0_i32_0 = arith.constant 0 : i32
    %c0_i32_1 = arith.constant 0 : i32
    %c0_i32_2 = arith.constant 0 : i32
    return %arg0, %c0_i32, %c0_i32_0, %c0_i32_1 : i32, i32, i32, i32
  }
  func.func @transform_3(%arg0: i32) -> (i32, i32, i32, i32) {
    %c0_i32 = arith.constant 0 : i32
    %c0_i32_0 = arith.constant 0 : i32
    %c0_i32_1 = arith.constant 0 : i32
    %c0_i32_2 = arith.constant 0 : i32
    return %arg0, %c0_i32, %c0_i32_0, %c0_i32_1 : i32, i32, i32, i32
  }
  func.func @transform_4(%arg0: i32) -> (i32, i32, i32, i32) {
    %c0_i32 = arith.constant 0 : i32
    %c0_i32_0 = arith.constant 0 : i32
    %c0_i32_1 = arith.constant 0 : i32
    %c0_i32_2 = arith.constant 0 : i32
    return %arg0, %c0_i32, %c0_i32_0, %c0_i32_1 : i32, i32, i32, i32
  }
}

</mosaic_0001>

<llo_original>
// kernel: maxpool2d.1
$region0: #{maxpool2d.1}
  #allocation0 [shape = 'u32[]', space=smem, size = 0x4, offset = 0x4, fixed_abs, tag = 'smem constant byte address 0x4 - core index']
  #allocation1 [shape = 'u32[144,128]{1,0:T(1,128)}', space=vmem, size = 0x12000, scoped, tag = 'internal scratch']
  %s0 = inlined_call_operand.vmem [shape: f32[1,28,28,96], index: 0, kind: input, shape index: {}]
  %s1 = inlined_call_operand.vmem [shape: f32[1,28,27,96], index: 1, kind: input, shape index: {}]
  %s2 = inlined_call_operand.vmem [shape: f32[1,27,28,96], index: 2, kind: input, shape index: {}]
  %s3 = inlined_call_operand.vmem [shape: f32[1,27,27,96], index: 3, kind: input, shape index: {}]
  %s4 = inlined_call_operand.vmem [shape: f32[1,27,27,96], index: 4, kind: output, shape index: {}]
  %s5 = sld [smem:[#allocation0]]
  $region26: #{maxpool2d.1} parent=0
    _
  %s7 = ssub.s32 1, %s5
  %s8 = scalar_select 0, %s7, %s5
  // Predicated region
  $region2: #{maxpool2d.1} parent=0 // pred_check
    _
  $region3: #{maxpool2d.1} parent=0 // pred_check_branch
    %10 = sbr.rel (0) target = $region5
  $region4: #{maxpool2d.1} parent=0 // pred_region
    _
  $region5: #{maxpool2d.1} parent=0 // pred_fallthru
    _
  // Predicated region
  $region6: #{maxpool2d.1} parent=0 // pred_check
    _
  $region7: #{maxpool2d.1} parent=0 // pred_check_branch
    %12 = sbr.rel (0) target = $region9
  $region8: #{maxpool2d.1} parent=0 // pred_region
    _
  $region9: #{maxpool2d.1} parent=0 // pred_fallthru
    _
  // Predicated region
  $region10: #{maxpool2d.1} parent=0 // pred_check
    _
  $region11: #{maxpool2d.1} parent=0 // pred_check_branch
    %14 = sbr.rel (0) target = $region13
  $region12: #{maxpool2d.1} parent=0 // pred_region
    _
  $region13: #{maxpool2d.1} parent=0 // pred_fallthru
    _
  // Predicated region
  $region14: #{maxpool2d.1} parent=0 // pred_check
    _
  $region15: #{maxpool2d.1} parent=0 // pred_check_branch
    %16 = sbr.rel (0) target = $region17
  $region16: #{maxpool2d.1} parent=0 // pred_region
    _
  $region17: #{maxpool2d.1} parent=0 // pred_fallthru
    _
  %v17 = vld [vmem:[%s0] sm:$0xff]
  %v18 = vld [vmem:[%s0 + $0x8] sm:$0xff]
  %v19 = vld [vmem:[%s0 + $0x10] sm:$0xff]
  %v20 = vld [vmem:[%s0 + $0x18] sm:$0xf]
  %v21 = vld [vmem:[%s0 + $0x20] sm:$0xff]
  %v22 = vld [vmem:[%s0 + $0x28] sm:$0xff]
  %v23 = vld [vmem:[%s0 + $0x30] sm:$0xff]
  %v24 = vld [vmem:[%s0 + $0x38] sm:$0xf]
  %v25 = vld [vmem:[%s0 + $0x40] sm:$0xff]
  %v26 = vld [vmem:[%s0 + $0x48] sm:$0xff]
  %v27 = vld [vmem:[%s0 + $0x50] sm:$0xff]
  %v28 = vld [vmem:[%s0 + $0x58] sm:$0xf]
  %v29 = vld [vmem:[%s0 + $0x60] sm:$0xff]
  %v30 = vld [vmem:[%s0 + $0x68] sm:$0xff]
  %v31 = vld [vmem:[%s0 + $0x70] sm:$0xff]
  %v32 = vld [vmem:[%s0 + $0x78] sm:$0xf]
  %v33 = vld [vmem:[%s0 + $0x80] sm:$0xff]
  %v34 = vld [vmem:[%s0 + $0x88] sm:$0xff]
  %v35 = vld [vmem:[%s0 + $0x90] sm:$0xff]
  %v36 = vld [vmem:[%s0 + $0x98] sm:$0xf]
  %v37 = vld [vmem:[%s0 + $0xa0] sm:$0xff]
  %v38 = vld [vmem:[%s0 + $0xa8] sm:$0xff]
  %v39 = vld [vmem:[%s0 + $0xb0] sm:$0xff]
  %v40 = vld [vmem:[%s0 + $0xb8] sm:$0xf]
  %v41 = vld [vmem:[%s0 + $0xc0] sm:$0xff]
  %v42 = vld [vmem:[%s0 + $0xc8] sm:$0xff]
  %v43 = vld [vmem:[%s0 + $0xd0] sm:$0xff]
  %v44 = vld [vmem:[%s0 + $0xd8] sm:$0xf]
  %v45 = vld [vmem:[%s0 + $0xe0] sm:$0xff]
  %v46 = vld [vmem:[%s0 + $0xe8] sm:$0xff]
  %v47 = vld [vmem:[%s0 + $0xf0] sm:$0xff]
  %v48 = vld [vmem:[%s0 + $0xf8] sm:$0xf]
  %v49 = vld [vmem:[%s0 + $0x100] sm:$0xff]
  %v50 = vld [vmem:[%s0 + $0x108] sm:$0xff]
  %v51 = vld [vmem:[%s0 + $0x110] sm:$0xff]
  %v52 = vld [vmem:[%s0 + $0x118] sm:$0xf]
  %v53 = vld [vmem:[%s0 + $0x120] sm:$0xff]
  %v54 = vld [vmem:[%s0 + $0x128] sm:$0xff]
  %v55 = vld [vmem:[%s0 + $0x130] sm:$0xff]
  %v56 = vld [vmem:[%s0 + $0x138] sm:$0xf]
  %v57 = vld [vmem:[%s0 + $0x140] sm:$0xff]
  %v58 = vld [vmem:[%s0 + $0x148] sm:$0xff]
  %v59 = vld [vmem:[%s0 + $0x150] sm:$0xff]
  %v60 = vld [vmem:[%s0 + $0x158] sm:$0xf]
  %v61 = vld [vmem:[%s0 + $0x160] sm:$0xff]
  %v62 = vld [vmem:[%s0 + $0x168] sm:$0xff]
  %v63 = vld [vmem:[%s0 + $0x170] sm:$0xff]
  %v64 = vld [vmem:[%s0 + $0x178] sm:$0xf]
  %v65 = vld [vmem:[%s0 + $0x180] sm:$0xff]
  %v66 = vld [vmem:[%s0 + $0x188] sm:$0xff]
  %v67 = vld [vmem:[%s0 + $0x190] sm:$0xff]
  %v68 = vld [vmem:[%s0 + $0x198] sm:$0xf]
  %v69 = vld [vmem:[%s0 + $0x1a0] sm:$0xff]
  %v70 = vld [vmem:[%s0 + $0x1a8] sm:$0xff]
  %v71 = vld [vmem:[%s0 + $0x1b0] sm:$0xff]
  %v72 = vld [vmem:[%s0 + $0x1b8] sm:$0xf]
  %v73 = vld [vmem:[%s0 + $0x1c0] sm:$0xff]
  %v74 = vld [vmem:[%s0 + $0x1c8] sm:$0xff]
  %v75 = vld [vmem:[%s0 + $0x1d0] sm:$0xff]
  %v76 = vld [vmem:[%s0 + $0x1d8] sm:$0xf]
  %v77 = vld [vmem:[%s0 + $0x1e0] sm:$0xff]
  %v78 = vld [vmem:[%s0 + $0x1e8] sm:$0xff]
  %v79 = vld [vmem:[%s0 + $0x1f0] sm:$0xff]
  %v80 = vld [vmem:[%s0 + $0x1f8] sm:$0xf]
  %v81 = vld [vmem:[%s0 + $0x200] sm:$0xff]
  %v82 = vld [vmem:[%s0 + $0x208] sm:$0xff]
  %v83 = vld [vmem:[%s0 + $0x210] sm:$0xff]
  %v84 = vld [vmem:[%s0 + $0x218] sm:$0xf]
  %v85 = vld [vmem:[%s0 + $0x220] sm:$0xff]
  %v86 = vld [vmem:[%s0 + $0x228] sm:$0xff]
  %v87 = vld [vmem:[%s0 + $0x230] sm:$0xff]
  %v88 = vld [vmem:[%s0 + $0x238] sm:$0xf]
  %v89 = vld [vmem:[%s0 + $0x240] sm:$0xff]
  %v90 = vld [vmem:[%s0 + $0x248] sm:$0xff]
  %v91 = vld [vmem:[%s0 + $0x250] sm:$0xff]
  %v92 = vld [vmem:[%s0 + $0x258] sm:$0xf]
  %v93 = vld [vmem:[%s0 + $0x260] sm:$0xff]
  %v94 = vld [vmem:[%s0 + $0x268] sm:$0xff]
  %v95 = vld [vmem:[%s0 + $0x270] sm:$0xff]
  %v96 = vld [vmem:[%s0 + $0x278] sm:$0xf]
  %v97 = vld [vmem:[%s0 + $0x280] sm:$0xff]
  %v98 = vld [vmem:[%s0 + $0x288] sm:$0xff]
  %v99 = vld [vmem:[%s0 + $0x290] sm:$0xff]
  %v100 = vld [vmem:[%s0 + $0x298] sm:$0xf]
  %v101 = vld [vmem:[%s0 + $0x2a0] sm:$0xff]
  %v102 = vld [vmem:[%s0 + $0x2a8] sm:$0xff]
  %v103 = vld [vmem:[%s0 + $0x2b0] sm:$0xff]
  %v104 = vld [vmem:[%s0 + $0x2b8] sm:$0xf]
  %v105 = vld [vmem:[%s0 + $0x2c0] sm:$0xff]
  %v106 = vld [vmem:[%s0 + $0x2c8] sm:$0xff]
  %v107 = vld [vmem:[%s0 + $0x2d0] sm:$0xff]
  %v108 = vld [vmem:[%s0 + $0x2d8] sm:$0xf]
  %v109 = vld [vmem:[%s0 + $0x2e0] sm:$0xff]
  %v110 = vld [vmem:[%s0 + $0x2e8] sm:$0xff]
  %v111 = vld [vmem:[%s0 + $0x2f0] sm:$0xff]
  %v112 = vld [vmem:[%s0 + $0x2f8] sm:$0xf]
  %v113 = vld [vmem:[%s0 + $0x300] sm:$0xff]
  %v114 = vld [vmem:[%s0 + $0x308] sm:$0xff]
  %v115 = vld [vmem:[%s0 + $0x310] sm:$0xff]
  %v116 = vld [vmem:[%s0 + $0x318] sm:$0xf]
  %v117 = vld [vmem:[%s0 + $0x320] sm:$0xff]
  %v118 = vld [vmem:[%s0 + $0x328] sm:$0xff]
  %v119 = vld [vmem:[%s0 + $0x330] sm:$0xff]
  %v120 = vld [vmem:[%s0 + $0x338] sm:$0xf]
  %v121 = vld [vmem:[%s0 + $0x340] sm:$0xff]
  %v122 = vld [vmem:[%s0 + $0x348] sm:$0xff]
  %v123 = vld [vmem:[%s0 + $0x350] sm:$0xff]
  %v124 = vld [vmem:[%s0 + $0x358] sm:$0xf]
  %vm233 = vcmask 1046528
  %v234 = vrot.slane %v17, 1
  %v235 = vrot.slane %v18, 1
  %v236 = vsel %vm233, %v234, %v235
  %v237 = vrot.slane %v19, 1
  %v238 = vsel %vm233, %v235, %v237
  %v239 = vrot.slane %v20, 1
  %v240 = vsel %vm233, %v237, %v239
  %v241 = vrot.slane %v21, 1
  %v242 = vrot.slane %v22, 1
  %v243 = vsel %vm233, %v241, %v242
  %v244 = vrot.slane %v23, 1
  %v245 = vsel %vm233, %v242, %v244
  %v246 = vrot.slane %v24, 1
  %v247 = vsel %vm233, %v244, %v246
  %v248 = vrot.slane %v25, 1
  %v249 = vrot.slane %v26, 1
  %v250 = vsel %vm233, %v248, %v249
  %v251 = vrot.slane %v27, 1
  %v252 = vsel %vm233, %v249, %v251
  %v253 = vrot.slane %v28, 1
  %v254 = vsel %vm233, %v251, %v253
  %v255 = vrot.slane %v29, 1
  %v256 = vrot.slane %v30, 1
  %v257 = vsel %vm233, %v255, %v256
  %v258 = vrot.slane %v31, 1
  %v259 = vsel %vm233, %v256, %v258
  %v260 = vrot.slane %v32, 1
  %v261 = vsel %vm233, %v258, %v260
  %v262 = vrot.slane %v33, 1
  %v263 = vrot.slane %v34, 1
  %v264 = vsel %vm233, %v262, %v263
  %v265 = vrot.slane %v35, 1
  %v266 = vsel %vm233, %v263, %v265
  %v267 = vrot.slane %v36, 1
  %v268 = vsel %vm233, %v265, %v267
  %v269 = vrot.slane %v37, 1
  %v270 = vrot.slane %v38, 1
  %v271 = vsel %vm233, %v269, %v270
  %v272 = vrot.slane %v39, 1
  %v273 = vsel %vm233, %v270, %v272
  %v274 = vrot.slane %v40, 1
  %v275 = vsel %vm233, %v272, %v274
  %v276 = vrot.slane %v41, 1
  %v277 = vrot.slane %v42, 1
  %v278 = vsel %vm233, %v276, %v277
  %v279 = vrot.slane %v43, 1
  %v280 = vsel %vm233, %v277, %v279
  %v281 = vrot.slane %v44, 1
  %v282 = vsel %vm233, %v279, %v281
  %v283 = vrot.slane %v45, 1
  %v284 = vrot.slane %v46, 1
  %v285 = vsel %vm233, %v283, %v284
  %v286 = vrot.slane %v47, 1
  %v287 = vsel %vm233, %v284, %v286
  %v288 = vrot.slane %v48, 1
  %v289 = vsel %vm233, %v286, %v288
  %v290 = vrot.slane %v49, 1
  %v291 = vrot.slane %v50, 1
  %v292 = vsel %vm233, %v290, %v291
  %v293 = vrot.slane %v51, 1
  %v294 = vsel %vm233, %v291, %v293
  %v295 = vrot.slane %v52, 1
  %v296 = vsel %vm233, %v293, %v295
  %v297 = vrot.slane %v53, 1
  %v298 = vrot.slane %v54, 1
  %v299 = vsel %vm233, %v297, %v298
  %v300 = vrot.slane %v55, 1
  %v301 = vsel %vm233, %v298, %v300
  %v302 = vrot.slane %v56, 1
  %v303 = vsel %vm233, %v300, %v302
  %v304 = vrot.slane %v57, 1
  %v305 = vrot.slane %v58, 1
  %v306 = vsel %vm233, %v304, %v305
  %v307 = vrot.slane %v59, 1
  %v308 = vsel %vm233, %v305, %v307
  %v309 = vrot.slane %v60, 1
  %v310 = vsel %vm233, %v307, %v309
  %v311 = vrot.slane %v61, 1
  %v312 = vrot.slane %v62, 1
  %v313 = vsel %vm233, %v311, %v312
  %v314 = vrot.slane %v63, 1
  %v315 = vsel %vm233, %v312, %v314
  %v316 = vrot.slane %v64, 1
  %v317 = vsel %vm233, %v314, %v316
  %v318 = vrot.slane %v65, 1
  %v319 = vrot.slane %v66, 1
  %v320 = vsel %vm233, %v318, %v319
  %v321 = vrot.slane %v67, 1
  %v322 = vsel %vm233, %v319, %v321
  %v323 = vrot.slane %v68, 1
  %v324 = vsel %vm233, %v321, %v323
  %v325 = vrot.slane %v69, 1
  %v326 = vrot.slane %v70, 1
  %v327 = vsel %vm233, %v325, %v326
  %v328 = vrot.slane %v71, 1
  %v329 = vsel %vm233, %v326, %v328
  %v330 = vrot.slane %v72, 1
  %v331 = vsel %vm233, %v328, %v330
  %v332 = vrot.slane %v73, 1
  %v333 = vrot.slane %v74, 1
  %v334 = vsel %vm233, %v332, %v333
  %v335 = vrot.slane %v75, 1
  %v336 = vsel %vm233, %v333, %v335
  %v337 = vrot.slane %v76, 1
  %v338 = vsel %vm233, %v335, %v337
  %v339 = vrot.slane %v77, 1
  %v340 = vrot.slane %v78, 1
  %v341 = vsel %vm233, %v339, %v340
  %v342 = vrot.slane %v79, 1
  %v343 = vsel %vm233, %v340, %v342
  %v344 = vrot.slane %v80, 1
  %v345 = vsel %vm233, %v342, %v344
  %v346 = vrot.slane %v81, 1
  %v347 = vrot.slane %v82, 1
  %v348 = vsel %vm233, %v346, %v347
  %v349 = vrot.slane %v83, 1
  %v350 = vsel %vm233, %v347, %v349
  %v351 = vrot.slane %v84, 1
  %v352 = vsel %vm233, %v349, %v351
  %v353 = vrot.slane %v85, 1
  %v354 = vrot.slane %v86, 1
  %v355 = vsel %vm233, %v353, %v354
  %v356 = vrot.slane %v87, 1
  %v357 = vsel %vm233, %v354, %v356
  %v358 = vrot.slane %v88, 1
  %v359 = vsel %vm233, %v356, %v358
  %v360 = vrot.slane %v89, 1
  %v361 = vrot.slane %v90, 1
  %v362 = vsel %vm233, %v360, %v361
  %v363 = vrot.slane %v91, 1
  %v364 = vsel %vm233, %v361, %v363
  %v365 = vrot.slane %v92, 1
  %v366 = vsel %vm233, %v363, %v365
  %v367 = vrot.slane %v93, 1
  %v368 = vrot.slane %v94, 1
  %v369 = vsel %vm233, %v367, %v368
  %v370 = vrot.slane %v95, 1
  %v371 = vsel %vm233, %v368, %v370
  %v372 = vrot.slane %v96, 1
  %v373 = vsel %vm233, %v370, %v372
  %v374 = vrot.slane %v97, 1
  %v375 = vrot.slane %v98, 1
  %v376 = vsel %vm233, %v374, %v375
  %v377 = vrot.slane %v99, 1
  %v378 = vsel %vm233, %v375, %v377
  %v379 = vrot.slane %v100, 1
  %v380 = vsel %vm233, %v377, %v379
  %v381 = vrot.slane %v101, 1
  %v382 = vrot.slane %v102, 1
  %v383 = vsel %vm233, %v381, %v382
  %v384 = vrot.slane %v103, 1
  %v385 = vsel %vm233, %v382, %v384
  %v386 = vrot.slane %v104, 1
  %v387 = vsel %vm233, %v384, %v386
  %v388 = vrot.slane %v105, 1
  %v389 = vrot.slane %v106, 1
  %v390 = vsel %vm233, %v388, %v389
  %v391 = vrot.slane %v107, 1
  %v392 = vsel %vm233, %v389, %v391
  %v393 = vrot.slane %v108, 1
  %v394 = vsel %vm233, %v391, %v393
  %v395 = vrot.slane %v109, 1
  %v396 = vrot.slane %v110, 1
  %v397 = vsel %vm233, %v395, %v396
  %v398 = vrot.slane %v111, 1
  %v399 = vsel %vm233, %v396, %v398
  %v400 = vrot.slane %v112, 1
  %v401 = vsel %vm233, %v398, %v400
  %v402 = vrot.slane %v113, 1
  %v403 = vrot.slane %v114, 1
  %v404 = vsel %vm233, %v402, %v403
  %v405 = vrot.slane %v115, 1
  %v406 = vsel %vm233, %v403, %v405
  %v407 = vrot.slane %v116, 1
  %v408 = vsel %vm233, %v405, %v407
  %v409 = vrot.slane %v117, 1
  %v410 = vrot.slane %v118, 1
  %v411 = vsel %vm233, %v409, %v410
  %v412 = vrot.slane %v119, 1
  %v413 = vsel %vm233, %v410, %v412
  %v414 = vrot.slane %v120, 1
  %v415 = vsel %vm233, %v412, %v414
  %v416 = vrot.slane %v121, 1
  %v417 = vrot.slane %v122, 1
  %v418 = vsel %vm233, %v416, %v417
  %v419 = vrot.slane %v123, 1
  %v420 = vsel %vm233, %v417, %v419
  %v421 = vrot.slane %v124, 1
  %v422 = vsel %vm233, %v419, %v421
  %v531 = vmax.f32 %v17, %v236
  %v532 = vmax.f32 %v18, %v238
  %v533 = vmax.f32 %v19, %v240
  %v534 = vmax.f32 %v20, %v239
  %v535 = vmax.f32 %v21, %v243
  %v536 = vmax.f32 %v22, %v245
  %v537 = vmax.f32 %v23, %v247
  %v538 = vmax.f32 %v24, %v246
  %v539 = vmax.f32 %v25, %v250
  %v540 = vmax.f32 %v26, %v252
  %v541 = vmax.f32 %v27, %v254
  %v542 = vmax.f32 %v28, %v253
  %v543 = vmax.f32 %v29, %v257
  %v544 = vmax.f32 %v30, %v259
  %v545 = vmax.f32 %v31, %v261
  %v546 = vmax.f32 %v32, %v260
  %v547 = vmax.f32 %v33, %v264
  %v548 = vmax.f32 %v34, %v266
  %v549 = vmax.f32 %v35, %v268
  %v550 = vmax.f32 %v36, %v267
  %v551 = vmax.f32 %v37, %v271
  %v552 = vmax.f32 %v38, %v273
  %v553 = vmax.f32 %v39, %v275
  %v554 = vmax.f32 %v40, %v274
  %v555 = vmax.f32 %v41, %v278
  %v556 = vmax.f32 %v42, %v280
  %v557 = vmax.f32 %v43, %v282
  %v558 = vmax.f32 %v44, %v281
  %v559 = vmax.f32 %v45, %v285
  %v560 = vmax.f32 %v46, %v287
  %v561 = vmax.f32 %v47, %v289
  %v562 = vmax.f32 %v48, %v288
  %v563 = vmax.f32 %v49, %v292
  %v564 = vmax.f32 %v50, %v294
  %v565 = vmax.f32 %v51, %v296
  %v566 = vmax.f32 %v52, %v295
  %v567 = vmax.f32 %v53, %v299
  %v568 = vmax.f32 %v54, %v301
  %v569 = vmax.f32 %v55, %v303
  %v570 = vmax.f32 %v56, %v302
  %v571 = vmax.f32 %v57, %v306
  %v572 = vmax.f32 %v58, %v308
  %v573 = vmax.f32 %v59, %v310
  %v574 = vmax.f32 %v60, %v309
  %v575 = vmax.f32 %v61, %v313
  %v576 = vmax.f32 %v62, %v315
  %v577 = vmax.f32 %v63, %v317
  %v578 = vmax.f32 %v64, %v316
  %v579 = vmax.f32 %v65, %v320
  %v580 = vmax.f32 %v66, %v322
  %v581 = vmax.f32 %v67, %v324
  %v582 = vmax.f32 %v68, %v323
  %v583 = vmax.f32 %v69, %v327
  %v584 = vmax.f32 %v70, %v329
  %v585 = vmax.f32 %v71, %v331
  %v586 = vmax.f32 %v72, %v330
  %v587 = vmax.f32 %v73, %v334
  %v588 = vmax.f32 %v74, %v336
  %v589 = vmax.f32 %v75, %v338
  %v590 = vmax.f32 %v76, %v337
  %v591 = vmax.f32 %v77, %v341
  %v592 = vmax.f32 %v78, %v343
  %v593 = vmax.f32 %v79, %v345
  %v594 = vmax.f32 %v80, %v344
  %v595 = vmax.f32 %v81, %v348
  %v596 = vmax.f32 %v82, %v350
  %v597 = vmax.f32 %v83, %v352
  %v598 = vmax.f32 %v84, %v351
  %v599 = vmax.f32 %v85, %v355
  %v600 = vmax.f32 %v86, %v357
  %v601 = vmax.f32 %v87, %v359
  %v602 = vmax.f32 %v88, %v358
  %v603 = vmax.f32 %v89, %v362
  %v604 = vmax.f32 %v90, %v364
  %v605 = vmax.f32 %v91, %v366
  %v606 = vmax.f32 %v92, %v365
  %v607 = vmax.f32 %v93, %v369
  %v608 = vmax.f32 %v94, %v371
  %v609 = vmax.f32 %v95, %v373
  %v610 = vmax.f32 %v96, %v372
  %v611 = vmax.f32 %v97, %v376
  %v612 = vmax.f32 %v98, %v378
  %v613 = vmax.f32 %v99, %v380
  %v614 = vmax.f32 %v100, %v379
  %v615 = vmax.f32 %v101, %v383
  %v616 = vmax.f32 %v102, %v385
  %v617 = vmax.f32 %v103, %v387
  %v618 = vmax.f32 %v104, %v386
  %v619 = vmax.f32 %v105, %v390
  %v620 = vmax.f32 %v106, %v392
  %v621 = vmax.f32 %v107, %v394
  %v622 = vmax.f32 %v108, %v393
  %v623 = vmax.f32 %v109, %v397
  %v624 = vmax.f32 %v110, %v399
  %v625 = vmax.f32 %v111, %v401
  %v626 = vmax.f32 %v112, %v400
  %v627 = vmax.f32 %v113, %v404
  %v628 = vmax.f32 %v114, %v406
  %v629 = vmax.f32 %v115, %v408
  %v630 = vmax.f32 %v116, %v407
  %v631 = vmax.f32 %v117, %v411
  %v632 = vmax.f32 %v118, %v413
  %v633 = vmax.f32 %v119, %v415
  %v634 = vmax.f32 %v120, %v414
  %v635 = vmax.f32 %v121, %v418
  %v636 = vmax.f32 %v122, %v420
  %v637 = vmax.f32 %v123, %v422
  %v638 = vmax.f32 %v124, %v421
  %v639 = vld [vmem:[%s1] sm:$0xff]
  %v640 = vld [vmem:[%s1 + $0x8] sm:$0xff]
  %v641 = vld [vmem:[%s1 + $0x10] sm:$0xff]
  %v642 = vld [vmem:[%s1 + $0x18] sm:$0x7]
  %v643 = vld [vmem:[%s1 + $0x20] sm:$0xff]
  %v644 = vld [vmem:[%s1 + $0x28] sm:$0xff]
  %v645 = vld [vmem:[%s1 + $0x30] sm:$0xff]
  %v646 = vld [vmem:[%s1 + $0x38] sm:$0x7]
  %v647 = vld [vmem:[%s1 + $0x40] sm:$0xff]
  %v648 = vld [vmem:[%s1 + $0x48] sm:$0xff]
  %v649 = vld [vmem:[%s1 + $0x50] sm:$0xff]
  %v650 = vld [vmem:[%s1 + $0x58] sm:$0x7]
  %v651 = vld [vmem:[%s1 + $0x60] sm:$0xff]
  %v652 = vld [vmem:[%s1 + $0x68] sm:$0xff]
  %v653 = vld [vmem:[%s1 + $0x70] sm:$0xff]
  %v654 = vld [vmem:[%s1 + $0x78] sm:$0x7]
  %v655 = vld [vmem:[%s1 + $0x80] sm:$0xff]
  %v656 = vld [vmem:[%s1 + $0x88] sm:$0xff]
  %v657 = vld [vmem:[%s1 + $0x90] sm:$0xff]
  %v658 = vld [vmem:[%s1 + $0x98] sm:$0x7]
  %v659 = vld [vmem:[%s1 + $0xa0] sm:$0xff]
  %v660 = vld [vmem:[%s1 + $0xa8] sm:$0xff]
  %v661 = vld [vmem:[%s1 + $0xb0] sm:$0xff]
  %v662 = vld [vmem:[%s1 + $0xb8] sm:$0x7]
  %v663 = vld [vmem:[%s1 + $0xc0] sm:$0xff]
  %v664 = vld [vmem:[%s1 + $0xc8] sm:$0xff]
  %v665 = vld [vmem:[%s1 + $0xd0] sm:$0xff]
  %v666 = vld [vmem:[%s1 + $0xd8] sm:$0x7]
  %v667 = vld [vmem:[%s1 + $0xe0] sm:$0xff]
  %v668 = vld [vmem:[%s1 + $0xe8] sm:$0xff]
  %v669 = vld [vmem:[%s1 + $0xf0] sm:$0xff]
  %v670 = vld [vmem:[%s1 + $0xf8] sm:$0x7]
  %v671 = vld [vmem:[%s1 + $0x100] sm:$0xff]
  %v672 = vld [vmem:[%s1 + $0x108] sm:$0xff]
  %v673 = vld [vmem:[%s1 + $0x110] sm:$0xff]
  %v674 = vld [vmem:[%s1 + $0x118] sm:$0x7]
  %v675 = vld [vmem:[%s1 + $0x120] sm:$0xff]
  %v676 = vld [vmem:[%s1 + $0x128] sm:$0xff]
  %v677 = vld [vmem:[%s1 + $0x130] sm:$0xff]
  %v678 = vld [vmem:[%s1 + $0x138] sm:$0x7]
  %v679 = vld [vmem:[%s1 + $0x140] sm:$0xff]
  %v680 = vld [vmem:[%s1 + $0x148] sm:$0xff]
  %v681 = vld [vmem:[%s1 + $0x150] sm:$0xff]
  %v682 = vld [vmem:[%s1 + $0x158] sm:$0x7]
  %v683 = vld [vmem:[%s1 + $0x160] sm:$0xff]
  %v684 = vld [vmem:[%s1 + $0x168] sm:$0xff]
  %v685 = vld [vmem:[%s1 + $0x170] sm:$0xff]
  %v686 = vld [vmem:[%s1 + $0x178] sm:$0x7]
  %v687 = vld [vmem:[%s1 + $0x180] sm:$0xff]
  %v688 = vld [vmem:[%s1 + $0x188] sm:$0xff]
  %v689 = vld [vmem:[%s1 + $0x190] sm:$0xff]
  %v690 = vld [vmem:[%s1 + $0x198] sm:$0x7]
  %v691 = vld [vmem:[%s1 + $0x1a0] sm:$0xff]
  %v692 = vld [vmem:[%s1 + $0x1a8] sm:$0xff]
  %v693 = vld [vmem:[%s1 + $0x1b0] sm:$0xff]
  %v694 = vld [vmem:[%s1 + $0x1b8] sm:$0x7]
  %v695 = vld [vmem:[%s1 + $0x1c0] sm:$0xff]
  %v696 = vld [vmem:[%s1 + $0x1c8] sm:$0xff]
  %v697 = vld [vmem:[%s1 + $0x1d0] sm:$0xff]
  %v698 = vld [vmem:[%s1 + $0x1d8] sm:$0x7]
  %v699 = vld [vmem:[%s1 + $0x1e0] sm:$0xff]
  %v700 = vld [vmem:[%s1 + $0x1e8] sm:$0xff]
  %v701 = vld [vmem:[%s1 + $0x1f0] sm:$0xff]
  %v702 = vld [vmem:[%s1 + $0x1f8] sm:$0x7]
  %v703 = vld [vmem:[%s1 + $0x200] sm:$0xff]
  %v704 = vld [vmem:[%s1 + $0x208] sm:$0xff]
  %v705 = vld [vmem:[%s1 + $0x210] sm:$0xff]
  %v706 = vld [vmem:[%s1 + $0x218] sm:$0x7]
  %v707 = vld [vmem:[%s1 + $0x220] sm:$0xff]
  %v708 = vld [vmem:[%s1 + $0x228] sm:$0xff]
  %v709 = vld [vmem:[%s1 + $0x230] sm:$0xff]
  %v710 = vld [vmem:[%s1 + $0x238] sm:$0x7]
  %v711 = vld [vmem:[%s1 + $0x240] sm:$0xff]
  %v712 = vld [vmem:[%s1 + $0x248] sm:$0xff]
  %v713 = vld [vmem:[%s1 + $0x250] sm:$0xff]
  %v714 = vld [vmem:[%s1 + $0x258] sm:$0x7]
  %v715 = vld [vmem:[%s1 + $0x260] sm:$0xff]
  %v716 = vld [vmem:[%s1 + $0x268] sm:$0xff]
  %v717 = vld [vmem:[%s1 + $0x270] sm:$0xff]
  %v718 = vld [vmem:[%s1 + $0x278] sm:$0x7]
  %v719 = vld [vmem:[%s1 + $0x280] sm:$0xff]
  %v720 = vld [vmem:[%s1 + $0x288] sm:$0xff]
  %v721 = vld [vmem:[%s1 + $0x290] sm:$0xff]
  %v722 = vld [vmem:[%s1 + $0x298] sm:$0x7]
  %v723 = vld [vmem:[%s1 + $0x2a0] sm:$0xff]
  %v724 = vld [vmem:[%s1 + $0x2a8] sm:$0xff]
  %v725 = vld [vmem:[%s1 + $0x2b0] sm:$0xff]
  %v726 = vld [vmem:[%s1 + $0x2b8] sm:$0x7]
  %v727 = vld [vmem:[%s1 + $0x2c0] sm:$0xff]
  %v728 = vld [vmem:[%s1 + $0x2c8] sm:$0xff]
  %v729 = vld [vmem:[%s1 + $0x2d0] sm:$0xff]
  %v730 = vld [vmem:[%s1 + $0x2d8] sm:$0x7]
  %v731 = vld [vmem:[%s1 + $0x2e0] sm:$0xff]
  %v732 = vld [vmem:[%s1 + $0x2e8] sm:$0xff]
  %v733 = vld [vmem:[%s1 + $0x2f0] sm:$0xff]
  %v734 = vld [vmem:[%s1 + $0x2f8] sm:$0x7]
  %v735 = vld [vmem:[%s1 + $0x300] sm:$0xff]
  %v736 = vld [vmem:[%s1 + $0x308] sm:$0xff]
  %v737 = vld [vmem:[%s1 + $0x310] sm:$0xff]
  %v738 = vld [vmem:[%s1 + $0x318] sm:$0x7]
  %v739 = vld [vmem:[%s1 + $0x320] sm:$0xff]
  %v740 = vld [vmem:[%s1 + $0x328] sm:$0xff]
  %v741 = vld [vmem:[%s1 + $0x330] sm:$0xff]
  %v742 = vld [vmem:[%s1 + $0x338] sm:$0x7]
  %v743 = vld [vmem:[%s1 + $0x340] sm:$0xff]
  %v744 = vld [vmem:[%s1 + $0x348] sm:$0xff]
  %v745 = vld [vmem:[%s1 + $0x350] sm:$0xff]
  %v746 = vld [vmem:[%s1 + $0x358] sm:$0x7]
  %v747 = vmax.f32 %v531, %v639
  %v748 = vmax.f32 %v532, %v640
  %v749 = vmax.f32 %v533, %v641
  %v750 = vmax.f32 %v534, %v642
  %v751 = vmax.f32 %v535, %v643
  %v752 = vmax.f32 %v536, %v644
  %v753 = vmax.f32 %v537, %v645
  %v754 = vmax.f32 %v538, %v646
  %v755 = vmax.f32 %v539, %v647
  %v756 = vmax.f32 %v540, %v648
  %v757 = vmax.f32 %v541, %v649
  %v758 = vmax.f32 %v542, %v650
  %v759 = vmax.f32 %v543, %v651
  %v760 = vmax.f32 %v544, %v652
  %v761 = vmax.f32 %v545, %v653
  %v762 = vmax.f32 %v546, %v654
  %v763 = vmax.f32 %v547, %v655
  %v764 = vmax.f32 %v548, %v656
  %v765 = vmax.f32 %v549, %v657
  %v766 = vmax.f32 %v550, %v658
  %v767 = vmax.f32 %v551, %v659
  %v768 = vmax.f32 %v552, %v660
  %v769 = vmax.f32 %v553, %v661
  %v770 = vmax.f32 %v554, %v662
  %v771 = vmax.f32 %v555, %v663
  %v772 = vmax.f32 %v556, %v664
  %v773 = vmax.f32 %v557, %v665
  %v774 = vmax.f32 %v558, %v666
  %v775 = vmax.f32 %v559, %v667
  %v776 = vmax.f32 %v560, %v668
  %v777 = vmax.f32 %v561, %v669
  %v778 = vmax.f32 %v562, %v670
  %v779 = vmax.f32 %v563, %v671
  %v780 = vmax.f32 %v564, %v672
  %v781 = vmax.f32 %v565, %v673
  %v782 = vmax.f32 %v566, %v674
  %v783 = vmax.f32 %v567, %v675
  %v784 = vmax.f32 %v568, %v676
  %v785 = vmax.f32 %v569, %v677
  %v786 = vmax.f32 %v570, %v678
  %v787 = vmax.f32 %v571, %v679
  %v788 = vmax.f32 %v572, %v680
  %v789 = vmax.f32 %v573, %v681
  %v790 = vmax.f32 %v574, %v682
  %v791 = vmax.f32 %v575, %v683
  %v792 = vmax.f32 %v576, %v684
  %v793 = vmax.f32 %v577, %v685
  %v794 = vmax.f32 %v578, %v686
  %v795 = vmax.f32 %v579, %v687
  %v796 = vmax.f32 %v580, %v688
  %v797 = vmax.f32 %v581, %v689
  %v798 = vmax.f32 %v582, %v690
  %v799 = vmax.f32 %v583, %v691
  %v800 = vmax.f32 %v584, %v692
  %v801 = vmax.f32 %v585, %v693
  %v802 = vmax.f32 %v586, %v694
  %v803 = vmax.f32 %v587, %v695
  %v804 = vmax.f32 %v588, %v696
  %v805 = vmax.f32 %v589, %v697
  %v806 = vmax.f32 %v590, %v698
  %v807 = vmax.f32 %v591, %v699
  %v808 = vmax.f32 %v592, %v700
  %v809 = vmax.f32 %v593, %v701
  %v810 = vmax.f32 %v594, %v702
  %v811 = vmax.f32 %v595, %v703
  %v812 = vmax.f32 %v596, %v704
  %v813 = vmax.f32 %v597, %v705
  %v814 = vmax.f32 %v598, %v706
  %v815 = vmax.f32 %v599, %v707
  %v816 = vmax.f32 %v600, %v708
  %v817 = vmax.f32 %v601, %v709
  %v818 = vmax.f32 %v602, %v710
  %v819 = vmax.f32 %v603, %v711
  %v820 = vmax.f32 %v604, %v712
  %v821 = vmax.f32 %v605, %v713
  %v822 = vmax.f32 %v606, %v714
  %v823 = vmax.f32 %v607, %v715
  %v824 = vmax.f32 %v608, %v716
  %v825 = vmax.f32 %v609, %v717
  %v826 = vmax.f32 %v610, %v718
  %v827 = vmax.f32 %v611, %v719
  %v828 = vmax.f32 %v612, %v720
  %v829 = vmax.f32 %v613, %v721
  %v830 = vmax.f32 %v614, %v722
  %v831 = vmax.f32 %v615, %v723
  %v832 = vmax.f32 %v616, %v724
  %v833 = vmax.f32 %v617, %v725
  %v834 = vmax.f32 %v618, %v726
  %v835 = vmax.f32 %v619, %v727
  %v836 = vmax.f32 %v620, %v728
  %v837 = vmax.f32 %v621, %v729
  %v838 = vmax.f32 %v622, %v730
  %v839 = vmax.f32 %v623, %v731
  %v840 = vmax.f32 %v624, %v732
  %v841 = vmax.f32 %v625, %v733
  %v842 = vmax.f32 %v626, %v734
  %v843 = vmax.f32 %v627, %v735
  %v844 = vmax.f32 %v628, %v736
  %v845 = vmax.f32 %v629, %v737
  %v846 = vmax.f32 %v630, %v738
  %v847 = vmax.f32 %v631, %v739
  %v848 = vmax.f32 %v632, %v740
  %v849 = vmax.f32 %v633, %v741
  %v850 = vmax.f32 %v634, %v742
  %v851 = vmax.f32 %v635, %v743
  %v852 = vmax.f32 %v636, %v744
  %v853 = vmax.f32 %v637, %v745
  %v854 = vmax.f32 %v638, %v746
  %v855 = vld [vmem:[%s2] sm:$0xff]
  %v856 = vld [vmem:[%s2 + $0x8] sm:$0xff]
  %v857 = vld [vmem:[%s2 + $0x10] sm:$0xff]
  %v858 = vld [vmem:[%s2 + $0x18] sm:$0xf]
  %v859 = vld [vmem:[%s2 + $0x20] sm:$0xff]
  %v860 = vld [vmem:[%s2 + $0x28] sm:$0xff]
  %v861 = vld [vmem:[%s2 + $0x30] sm:$0xff]
  %v862 = vld [vmem:[%s2 + $0x38] sm:$0xf]
  %v863 = vld [vmem:[%s2 + $0x40] sm:$0xff]
  %v864 = vld [vmem:[%s2 + $0x48] sm:$0xff]
  %v865 = vld [vmem:[%s2 + $0x50] sm:$0xff]
  %v866 = vld [vmem:[%s2 + $0x58] sm:$0xf]
  %v867 = vld [vmem:[%s2 + $0x60] sm:$0xff]
  %v868 = vld [vmem:[%s2 + $0x68] sm:$0xff]
  %v869 = vld [vmem:[%s2 + $0x70] sm:$0xff]
  %v870 = vld [vmem:[%s2 + $0x78] sm:$0xf]
  %v871 = vld [vmem:[%s2 + $0x80] sm:$0xff]
  %v872 = vld [vmem:[%s2 + $0x88] sm:$0xff]
  %v873 = vld [vmem:[%s2 + $0x90] sm:$0xff]
  %v874 = vld [vmem:[%s2 + $0x98] sm:$0xf]
  %v875 = vld [vmem:[%s2 + $0xa0] sm:$0xff]
  %v876 = vld [vmem:[%s2 + $0xa8] sm:$0xff]
  %v877 = vld [vmem:[%s2 + $0xb0] sm:$0xff]
  %v878 = vld [vmem:[%s2 + $0xb8] sm:$0xf]
  %v879 = vld [vmem:[%s2 + $0xc0] sm:$0xff]
  %v880 = vld [vmem:[%s2 + $0xc8] sm:$0xff]
  %v881 = vld [vmem:[%s2 + $0xd0] sm:$0xff]
  %v882 = vld [vmem:[%s2 + $0xd8] sm:$0xf]
  %v883 = vld [vmem:[%s2 + $0xe0] sm:$0xff]
  %v884 = vld [vmem:[%s2 + $0xe8] sm:$0xff]
  %v885 = vld [vmem:[%s2 + $0xf0] sm:$0xff]
  %v886 = vld [vmem:[%s2 + $0xf8] sm:$0xf]
  %v887 = vld [vmem:[%s2 + $0x100] sm:$0xff]
  %v888 = vld [vmem:[%s2 + $0x108] sm:$0xff]
  %v889 = vld [vmem:[%s2 + $0x110] sm:$0xff]
  %v890 = vld [vmem:[%s2 + $0x118] sm:$0xf]
  %v891 = vld [vmem:[%s2 + $0x120] sm:$0xff]
  %v892 = vld [vmem:[%s2 + $0x128] sm:$0xff]
  %v893 = vld [vmem:[%s2 + $0x130] sm:$0xff]
  %v894 = vld [vmem:[%s2 + $0x138] sm:$0xf]
  %v895 = vld [vmem:[%s2 + $0x140] sm:$0xff]
  %v896 = vld [vmem:[%s2 + $0x148] sm:$0xff]
  %v897 = vld [vmem:[%s2 + $0x150] sm:$0xff]
  %v898 = vld [vmem:[%s2 + $0x158] sm:$0xf]
  %v899 = vld [vmem:[%s2 + $0x160] sm:$0xff]
  %v900 = vld [vmem:[%s2 + $0x168] sm:$0xff]
  %v901 = vld [vmem:[%s2 + $0x170] sm:$0xff]
  %v902 = vld [vmem:[%s2 + $0x178] sm:$0xf]
  %v903 = vld [vmem:[%s2 + $0x180] sm:$0xff]
  %v904 = vld [vmem:[%s2 + $0x188] sm:$0xff]
  %v905 = vld [vmem:[%s2 + $0x190] sm:$0xff]
  %v906 = vld [vmem:[%s2 + $0x198] sm:$0xf]
  %v907 = vld [vmem:[%s2 + $0x1a0] sm:$0xff]
  %v908 = vld [vmem:[%s2 + $0x1a8] sm:$0xff]
  %v909 = vld [vmem:[%s2 + $0x1b0] sm:$0xff]
  %v910 = vld [vmem:[%s2 + $0x1b8] sm:$0xf]
  %v911 = vld [vmem:[%s2 + $0x1c0] sm:$0xff]
  %v912 = vld [vmem:[%s2 + $0x1c8] sm:$0xff]
  %v913 = vld [vmem:[%s2 + $0x1d0] sm:$0xff]
  %v914 = vld [vmem:[%s2 + $0x1d8] sm:$0xf]
  %v915 = vld [vmem:[%s2 + $0x1e0] sm:$0xff]
  %v916 = vld [vmem:[%s2 + $0x1e8] sm:$0xff]
  %v917 = vld [vmem:[%s2 + $0x1f0] sm:$0xff]
  %v918 = vld [vmem:[%s2 + $0x1f8] sm:$0xf]
  %v919 = vld [vmem:[%s2 + $0x200] sm:$0xff]
  %v920 = vld [vmem:[%s2 + $0x208] sm:$0xff]
  %v921 = vld [vmem:[%s2 + $0x210] sm:$0xff]
  %v922 = vld [vmem:[%s2 + $0x218] sm:$0xf]
  %v923 = vld [vmem:[%s2 + $0x220] sm:$0xff]
  %v924 = vld [vmem:[%s2 + $0x228] sm:$0xff]
  %v925 = vld [vmem:[%s2 + $0x230] sm:$0xff]
  %v926 = vld [vmem:[%s2 + $0x238] sm:$0xf]
  %v927 = vld [vmem:[%s2 + $0x240] sm:$0xff]
  %v928 = vld [vmem:[%s2 + $0x248] sm:$0xff]
  %v929 = vld [vmem:[%s2 + $0x250] sm:$0xff]
  %v930 = vld [vmem:[%s2 + $0x258] sm:$0xf]
  %v931 = vld [vmem:[%s2 + $0x260] sm:$0xff]
  %v932 = vld [vmem:[%s2 + $0x268] sm:$0xff]
  %v933 = vld [vmem:[%s2 + $0x270] sm:$0xff]
  %v934 = vld [vmem:[%s2 + $0x278] sm:$0xf]
  %v935 = vld [vmem:[%s2 + $0x280] sm:$0xff]
  %v936 = vld [vmem:[%s2 + $0x288] sm:$0xff]
  %v937 = vld [vmem:[%s2 + $0x290] sm:$0xff]
  %v938 = vld [vmem:[%s2 + $0x298] sm:$0xf]
  %v939 = vld [vmem:[%s2 + $0x2a0] sm:$0xff]
  %v940 = vld [vmem:[%s2 + $0x2a8] sm:$0xff]
  %v941 = vld [vmem:[%s2 + $0x2b0] sm:$0xff]
  %v942 = vld [vmem:[%s2 + $0x2b8] sm:$0xf]
  %v943 = vld [vmem:[%s2 + $0x2c0] sm:$0xff]
  %v944 = vld [vmem:[%s2 + $0x2c8] sm:$0xff]
  %v945 = vld [vmem:[%s2 + $0x2d0] sm:$0xff]
  %v946 = vld [vmem:[%s2 + $0x2d8] sm:$0xf]
  %v947 = vld [vmem:[%s2 + $0x2e0] sm:$0xff]
  %v948 = vld [vmem:[%s2 + $0x2e8] sm:$0xff]
  %v949 = vld [vmem:[%s2 + $0x2f0] sm:$0xff]
  %v950 = vld [vmem:[%s2 + $0x2f8] sm:$0xf]
  %v951 = vld [vmem:[%s2 + $0x300] sm:$0xff]
  %v952 = vld [vmem:[%s2 + $0x308] sm:$0xff]
  %v953 = vld [vmem:[%s2 + $0x310] sm:$0xff]
  %v954 = vld [vmem:[%s2 + $0x318] sm:$0xf]
  %v955 = vld [vmem:[%s2 + $0x320] sm:$0xff]
  %v956 = vld [vmem:[%s2 + $0x328] sm:$0xff]
  %v957 = vld [vmem:[%s2 + $0x330] sm:$0xff]
  %v958 = vld [vmem:[%s2 + $0x338] sm:$0xf]
  %v959 = vld [vmem:[%s2 + $0x340] sm:$0xff]
  %v960 = vld [vmem:[%s2 + $0x348] sm:$0xff]
  %v961 = vld [vmem:[%s2 + $0x350] sm:$0xff]
  %v962 = vld [vmem:[%s2 + $0x358] sm:$0xf]
  %v963 = vmax.f32 %v747, %v855
  %v964 = vmax.f32 %v748, %v856
  %v965 = vmax.f32 %v749, %v857
  %v966 = vmax.f32 %v750, %v858
  %v967 = vmax.f32 %v751, %v859
  %v968 = vmax.f32 %v752, %v860
  %v969 = vmax.f32 %v753, %v861
  %v970 = vmax.f32 %v754, %v862
  %v971 = vmax.f32 %v755, %v863
  %v972 = vmax.f32 %v756, %v864
  %v973 = vmax.f32 %v757, %v865
  %v974 = vmax.f32 %v758, %v866
  %v975 = vmax.f32 %v759, %v867
  %v976 = vmax.f32 %v760, %v868
  %v977 = vmax.f32 %v761, %v869
  %v978 = vmax.f32 %v762, %v870
  %v979 = vmax.f32 %v763, %v871
  %v980 = vmax.f32 %v764, %v872
  %v981 = vmax.f32 %v765, %v873
  %v982 = vmax.f32 %v766, %v874
  %v983 = vmax.f32 %v767, %v875
  %v984 = vmax.f32 %v768, %v876
  %v985 = vmax.f32 %v769, %v877
  %v986 = vmax.f32 %v770, %v878
  %v987 = vmax.f32 %v771, %v879
  %v988 = vmax.f32 %v772, %v880
  %v989 = vmax.f32 %v773, %v881
  %v990 = vmax.f32 %v774, %v882
  %v991 = vmax.f32 %v775, %v883
  %v992 = vmax.f32 %v776, %v884
  %v993 = vmax.f32 %v777, %v885
  %v994 = vmax.f32 %v778, %v886
  %v995 = vmax.f32 %v779, %v887
  %v996 = vmax.f32 %v780, %v888
  %v997 = vmax.f32 %v781, %v889
  %v998 = vmax.f32 %v782, %v890
  %v999 = vmax.f32 %v783, %v891
  %v1000 = vmax.f32 %v784, %v892
  %v1001 = vmax.f32 %v785, %v893
  %v1002 = vmax.f32 %v786, %v894
  %v1003 = vmax.f32 %v787, %v895
  %v1004 = vmax.f32 %v788, %v896
  %v1005 = vmax.f32 %v789, %v897
  %v1006 = vmax.f32 %v790, %v898
  %v1007 = vmax.f32 %v791, %v899
  %v1008 = vmax.f32 %v792, %v900
  %v1009 = vmax.f32 %v793, %v901
  %v1010 = vmax.f32 %v794, %v902
  %v1011 = vmax.f32 %v795, %v903
  %v1012 = vmax.f32 %v796, %v904
  %v1013 = vmax.f32 %v797, %v905
  %v1014 = vmax.f32 %v798, %v906
  %v1015 = vmax.f32 %v799, %v907
  %v1016 = vmax.f32 %v800, %v908
  %v1017 = vmax.f32 %v801, %v909
  %v1018 = vmax.f32 %v802, %v910
  %v1019 = vmax.f32 %v803, %v911
  %v1020 = vmax.f32 %v804, %v912
  %v1021 = vmax.f32 %v805, %v913
  %v1022 = vmax.f32 %v806, %v914
  %v1023 = vmax.f32 %v807, %v915
  %v1024 = vmax.f32 %v808, %v916
  %v1025 = vmax.f32 %v809, %v917
  %v1026 = vmax.f32 %v810, %v918
  %v1027 = vmax.f32 %v811, %v919
  %v1028 = vmax.f32 %v812, %v920
  %v1029 = vmax.f32 %v813, %v921
  %v1030 = vmax.f32 %v814, %v922
  %v1031 = vmax.f32 %v815, %v923
  %v1032 = vmax.f32 %v816, %v924
  %v1033 = vmax.f32 %v817, %v925
  %v1034 = vmax.f32 %v818, %v926
  %v1035 = vmax.f32 %v819, %v927
  %v1036 = vmax.f32 %v820, %v928
  %v1037 = vmax.f32 %v821, %v929
  %v1038 = vmax.f32 %v822, %v930
  %v1039 = vmax.f32 %v823, %v931
  %v1040 = vmax.f32 %v824, %v932
  %v1041 = vmax.f32 %v825, %v933
  %v1042 = vmax.f32 %v826, %v934
  %v1043 = vmax.f32 %v827, %v935
  %v1044 = vmax.f32 %v828, %v936
  %v1045 = vmax.f32 %v829, %v937
  %v1046 = vmax.f32 %v830, %v938
  %v1047 = vmax.f32 %v831, %v939
  %v1048 = vmax.f32 %v832, %v940
  %v1049 = vmax.f32 %v833, %v941
  %v1050 = vmax.f32 %v834, %v942
  %v1051 = vmax.f32 %v835, %v943
  %v1052 = vmax.f32 %v836, %v944
  %v1053 = vmax.f32 %v837, %v945
  %v1054 = vmax.f32 %v838, %v946
  %v1055 = vmax.f32 %v839, %v947
  %v1056 = vmax.f32 %v840, %v948
  %v1057 = vmax.f32 %v841, %v949
  %v1058 = vmax.f32 %v842, %v950
  %v1059 = vmax.f32 %v843, %v951
  %v1060 = vmax.f32 %v844, %v952
  %v1061 = vmax.f32 %v845, %v953
  %v1062 = vmax.f32 %v846, %v954
  %v1063 = vmax.f32 %v847, %v955
  %v1064 = vmax.f32 %v848, %v956
  %v1065 = vmax.f32 %v849, %v957
  %v1066 = vmax.f32 %v850, %v958
  %v1067 = vmax.f32 %v851, %v959
  %v1068 = vmax.f32 %v852, %v960
  %v1069 = vmax.f32 %v853, %v961
  %v1070 = vmax.f32 %v854, %v962
  %v1179 = vrot.slane %v855, 1
  %v1180 = vrot.slane %v856, 1
  %v1181 = vsel %vm233, %v1179, %v1180
  %v1182 = vrot.slane %v857, 1
  %v1183 = vsel %vm233, %v1180, %v1182
  %v1184 = vrot.slane %v858, 1
  %v1185 = vsel %vm233, %v1182, %v1184
  %v1186 = vrot.slane %v859, 1
  %v1187 = vrot.slane %v860, 1
  %v1188 = vsel %vm233, %v1186, %v1187
  %v1189 = vrot.slane %v861, 1
  %v1190 = vsel %vm233, %v1187, %v1189
  %v1191 = vrot.slane %v862, 1
  %v1192 = vsel %vm233, %v1189, %v1191
  %v1193 = vrot.slane %v863, 1
  %v1194 = vrot.slane %v864, 1
  %v1195 = vsel %vm233, %v1193, %v1194
  %v1196 = vrot.slane %v865, 1
  %v1197 = vsel %vm233, %v1194, %v1196
  %v1198 = vrot.slane %v866, 1
  %v1199 = vsel %vm233, %v1196, %v1198
  %v1200 = vrot.slane %v867, 1
  %v1201 = vrot.slane %v868, 1
  %v1202 = vsel %vm233, %v1200, %v1201
  %v1203 = vrot.slane %v869, 1
  %v1204 = vsel %vm233, %v1201, %v1203
  %v1205 = vrot.slane %v870, 1
  %v1206 = vsel %vm233, %v1203, %v1205
  %v1207 = vrot.slane %v871, 1
  %v1208 = vrot.slane %v872, 1
  %v1209 = vsel %vm233, %v1207, %v1208
  %v1210 = vrot.slane %v873, 1
  %v1211 = vsel %vm233, %v1208, %v1210
  %v1212 = vrot.slane %v874, 1
  %v1213 = vsel %vm233, %v1210, %v1212
  %v1214 = vrot.slane %v875, 1
  %v1215 = vrot.slane %v876, 1
  %v1216 = vsel %vm233, %v1214, %v1215
  %v1217 = vrot.slane %v877, 1
  %v1218 = vsel %vm233, %v1215, %v1217
  %v1219 = vrot.slane %v878, 1
  %v1220 = vsel %vm233, %v1217, %v1219
  %v1221 = vrot.slane %v879, 1
  %v1222 = vrot.slane %v880, 1
  %v1223 = vsel %vm233, %v1221, %v1222
  %v1224 = vrot.slane %v881, 1
  %v1225 = vsel %vm233, %v1222, %v1224
  %v1226 = vrot.slane %v882, 1
  %v1227 = vsel %vm233, %v1224, %v1226
  %v1228 = vrot.slane %v883, 1
  %v1229 = vrot.slane %v884, 1
  %v1230 = vsel %vm233, %v1228, %v1229
  %v1231 = vrot.slane %v885, 1
  %v1232 = vsel %vm233, %v1229, %v1231
  %v1233 = vrot.slane %v886, 1
  %v1234 = vsel %vm233, %v1231, %v1233
  %v1235 = vrot.slane %v887, 1
  %v1236 = vrot.slane %v888, 1
  %v1237 = vsel %vm233, %v1235, %v1236
  %v1238 = vrot.slane %v889, 1
  %v1239 = vsel %vm233, %v1236, %v1238
  %v1240 = vrot.slane %v890, 1
  %v1241 = vsel %vm233, %v1238, %v1240
  %v1242 = vrot.slane %v891, 1
  %v1243 = vrot.slane %v892, 1
  %v1244 = vsel %vm233, %v1242, %v1243
  %v1245 = vrot.slane %v893, 1
  %v1246 = vsel %vm233, %v1243, %v1245
  %v1247 = vrot.slane %v894, 1
  %v1248 = vsel %vm233, %v1245, %v1247
  %v1249 = vrot.slane %v895, 1
  %v1250 = vrot.slane %v896, 1
  %v1251 = vsel %vm233, %v1249, %v1250
  %v1252 = vrot.slane %v897, 1
  %v1253 = vsel %vm233, %v1250, %v1252
  %v1254 = vrot.slane %v898, 1
  %v1255 = vsel %vm233, %v1252, %v1254
  %v1256 = vrot.slane %v899, 1
  %v1257 = vrot.slane %v900, 1
  %v1258 = vsel %vm233, %v1256, %v1257
  %v1259 = vrot.slane %v901, 1
  %v1260 = vsel %vm233, %v1257, %v1259
  %v1261 = vrot.slane %v902, 1
  %v1262 = vsel %vm233, %v1259, %v1261
  %v1263 = vrot.slane %v903, 1
  %v1264 = vrot.slane %v904, 1
  %v1265 = vsel %vm233, %v1263, %v1264
  %v1266 = vrot.slane %v905, 1
  %v1267 = vsel %vm233, %v1264, %v1266
  %v1268 = vrot.slane %v906, 1
  %v1269 = vsel %vm233, %v1266, %v1268
  %v1270 = vrot.slane %v907, 1
  %v1271 = vrot.slane %v908, 1
  %v1272 = vsel %vm233, %v1270, %v1271
  %v1273 = vrot.slane %v909, 1
  %v1274 = vsel %vm233, %v1271, %v1273
  %v1275 = vrot.slane %v910, 1
  %v1276 = vsel %vm233, %v1273, %v1275
  %v1277 = vrot.slane %v911, 1
  %v1278 = vrot.slane %v912, 1
  %v1279 = vsel %vm233, %v1277, %v1278
  %v1280 = vrot.slane %v913, 1
  %v1281 = vsel %vm233, %v1278, %v1280
  %v1282 = vrot.slane %v914, 1
  %v1283 = vsel %vm233, %v1280, %v1282
  %v1284 = vrot.slane %v915, 1
  %v1285 = vrot.slane %v916, 1
  %v1286 = vsel %vm233, %v1284, %v1285
  %v1287 = vrot.slane %v917, 1
  %v1288 = vsel %vm233, %v1285, %v1287
  %v1289 = vrot.slane %v918, 1
  %v1290 = vsel %vm233, %v1287, %v1289
  %v1291 = vrot.slane %v919, 1
  %v1292 = vrot.slane %v920, 1
  %v1293 = vsel %vm233, %v1291, %v1292
  %v1294 = vrot.slane %v921, 1
  %v1295 = vsel %vm233, %v1292, %v1294
  %v1296 = vrot.slane %v922, 1
  %v1297 = vsel %vm233, %v1294, %v1296
  %v1298 = vrot.slane %v923, 1
  %v1299 = vrot.slane %v924, 1
  %v1300 = vsel %vm233, %v1298, %v1299
  %v1301 = vrot.slane %v925, 1
  %v1302 = vsel %vm233, %v1299, %v1301
  %v1303 = vrot.slane %v926, 1
  %v1304 = vsel %vm233, %v1301, %v1303
  %v1305 = vrot.slane %v927, 1
  %v1306 = vrot.slane %v928, 1
  %v1307 = vsel %vm233, %v1305, %v1306
  %v1308 = vrot.slane %v929, 1
  %v1309 = vsel %vm233, %v1306, %v1308
  %v1310 = vrot.slane %v930, 1
  %v1311 = vsel %vm233, %v1308, %v1310
  %v1312 = vrot.slane %v931, 1
  %v1313 = vrot.slane %v932, 1
  %v1314 = vsel %vm233, %v1312, %v1313
  %v1315 = vrot.slane %v933, 1
  %v1316 = vsel %vm233, %v1313, %v1315
  %v1317 = vrot.slane %v934, 1
  %v1318 = vsel %vm233, %v1315, %v1317
  %v1319 = vrot.slane %v935, 1
  %v1320 = vrot.slane %v936, 1
  %v1321 = vsel %vm233, %v1319, %v1320
  %v1322 = vrot.slane %v937, 1
  %v1323 = vsel %vm233, %v1320, %v1322
  %v1324 = vrot.slane %v938, 1
  %v1325 = vsel %vm233, %v1322, %v1324
  %v1326 = vrot.slane %v939, 1
  %v1327 = vrot.slane %v940, 1
  %v1328 = vsel %vm233, %v1326, %v1327
  %v1329 = vrot.slane %v941, 1
  %v1330 = vsel %vm233, %v1327, %v1329
  %v1331 = vrot.slane %v942, 1
  %v1332 = vsel %vm233, %v1329, %v1331
  %v1333 = vrot.slane %v943, 1
  %v1334 = vrot.slane %v944, 1
  %v1335 = vsel %vm233, %v1333, %v1334
  %v1336 = vrot.slane %v945, 1
  %v1337 = vsel %vm233, %v1334, %v1336
  %v1338 = vrot.slane %v946, 1
  %v1339 = vsel %vm233, %v1336, %v1338
  %v1340 = vrot.slane %v947, 1
  %v1341 = vrot.slane %v948, 1
  %v1342 = vsel %vm233, %v1340, %v1341
  %v1343 = vrot.slane %v949, 1
  %v1344 = vsel %vm233, %v1341, %v1343
  %v1345 = vrot.slane %v950, 1
  %v1346 = vsel %vm233, %v1343, %v1345
  %v1347 = vrot.slane %v951, 1
  %v1348 = vrot.slane %v952, 1
  %v1349 = vsel %vm233, %v1347, %v1348
  %v1350 = vrot.slane %v953, 1
  %v1351 = vsel %vm233, %v1348, %v1350
  %v1352 = vrot.slane %v954, 1
  %v1353 = vsel %vm233, %v1350, %v1352
  %v1354 = vrot.slane %v955, 1
  %v1355 = vrot.slane %v956, 1
  %v1356 = vsel %vm233, %v1354, %v1355
  %v1357 = vrot.slane %v957, 1
  %v1358 = vsel %vm233, %v1355, %v1357
  %v1359 = vrot.slane %v958, 1
  %v1360 = vsel %vm233, %v1357, %v1359
  %v1361 = vrot.slane %v959, 1
  %v1362 = vrot.slane %v960, 1
  %v1363 = vsel %vm233, %v1361, %v1362
  %v1364 = vrot.slane %v961, 1
  %v1365 = vsel %vm233, %v1362, %v1364
  %v1366 = vrot.slane %v962, 1
  %v1367 = vsel %vm233, %v1364, %v1366
  %v1476 = vmax.f32 %v963, %v1181
  %v1477 = vmax.f32 %v964, %v1183
  %v1478 = vmax.f32 %v965, %v1185
  %v1479 = vmax.f32 %v966, %v1184
  %v1480 = vmax.f32 %v967, %v1188
  %v1481 = vmax.f32 %v968, %v1190
  %v1482 = vmax.f32 %v969, %v1192
  %v1483 = vmax.f32 %v970, %v1191
  %v1484 = vmax.f32 %v971, %v1195
  %v1485 = vmax.f32 %v972, %v1197
  %v1486 = vmax.f32 %v973, %v1199
  %v1487 = vmax.f32 %v974, %v1198
  %v1488 = vmax.f32 %v975, %v1202
  %v1489 = vmax.f32 %v976, %v1204
  %v1490 = vmax.f32 %v977, %v1206
  %v1491 = vmax.f32 %v978, %v1205
  %v1492 = vmax.f32 %v979, %v1209
  %v1493 = vmax.f32 %v980, %v1211
  %v1494 = vmax.f32 %v981, %v1213
  %v1495 = vmax.f32 %v982, %v1212
  %v1496 = vmax.f32 %v983, %v1216
  %v1497 = vmax.f32 %v984, %v1218
  %v1498 = vmax.f32 %v985, %v1220
  %v1499 = vmax.f32 %v986, %v1219
  %v1500 = vmax.f32 %v987, %v1223
  %v1501 = vmax.f32 %v988, %v1225
  %v1502 = vmax.f32 %v989, %v1227
  %v1503 = vmax.f32 %v990, %v1226
  %v1504 = vmax.f32 %v991, %v1230
  %v1505 = vmax.f32 %v992, %v1232
  %v1506 = vmax.f32 %v993, %v1234
  %v1507 = vmax.f32 %v994, %v1233
  %v1508 = vmax.f32 %v995, %v1237
  %v1509 = vmax.f32 %v996, %v1239
  %v1510 = vmax.f32 %v997, %v1241
  %v1511 = vmax.f32 %v998, %v1240
  %v1512 = vmax.f32 %v999, %v1244
  %v1513 = vmax.f32 %v1000, %v1246
  %v1514 = vmax.f32 %v1001, %v1248
  %v1515 = vmax.f32 %v1002, %v1247
  %v1516 = vmax.f32 %v1003, %v1251
  %v1517 = vmax.f32 %v1004, %v1253
  %v1518 = vmax.f32 %v1005, %v1255
  %v1519 = vmax.f32 %v1006, %v1254
  %v1520 = vmax.f32 %v1007, %v1258
  %v1521 = vmax.f32 %v1008, %v1260
  %v1522 = vmax.f32 %v1009, %v1262
  %v1523 = vmax.f32 %v1010, %v1261
  %v1524 = vmax.f32 %v1011, %v1265
  %v1525 = vmax.f32 %v1012, %v1267
  %v1526 = vmax.f32 %v1013, %v1269
  %v1527 = vmax.f32 %v1014, %v1268
  %v1528 = vmax.f32 %v1015, %v1272
  %v1529 = vmax.f32 %v1016, %v1274
  %v1530 = vmax.f32 %v1017, %v1276
  %v1531 = vmax.f32 %v1018, %v1275
  %v1532 = vmax.f32 %v1019, %v1279
  %v1533 = vmax.f32 %v1020, %v1281
  %v1534 = vmax.f32 %v1021, %v1283
  %v1535 = vmax.f32 %v1022, %v1282
  %v1536 = vmax.f32 %v1023, %v1286
  %v1537 = vmax.f32 %v1024, %v1288
  %v1538 = vmax.f32 %v1025, %v1290
  %v1539 = vmax.f32 %v1026, %v1289
  %v1540 = vmax.f32 %v1027, %v1293
  %v1541 = vmax.f32 %v1028, %v1295
  %v1542 = vmax.f32 %v1029, %v1297
  %v1543 = vmax.f32 %v1030, %v1296
  %v1544 = vmax.f32 %v1031, %v1300
  %v1545 = vmax.f32 %v1032, %v1302
  %v1546 = vmax.f32 %v1033, %v1304
  %v1547 = vmax.f32 %v1034, %v1303
  %v1548 = vmax.f32 %v1035, %v1307
  %v1549 = vmax.f32 %v1036, %v1309
  %v1550 = vmax.f32 %v1037, %v1311
  %v1551 = vmax.f32 %v1038, %v1310
  %v1552 = vmax.f32 %v1039, %v1314
  %v1553 = vmax.f32 %v1040, %v1316
  %v1554 = vmax.f32 %v1041, %v1318
  %v1555 = vmax.f32 %v1042, %v1317
  %v1556 = vmax.f32 %v1043, %v1321
  %v1557 = vmax.f32 %v1044, %v1323
  %v1558 = vmax.f32 %v1045, %v1325
  %v1559 = vmax.f32 %v1046, %v1324
  %v1560 = vmax.f32 %v1047, %v1328
  %v1561 = vmax.f32 %v1048, %v1330
  %v1562 = vmax.f32 %v1049, %v1332
  %v1563 = vmax.f32 %v1050, %v1331
  %v1564 = vmax.f32 %v1051, %v1335
  %v1565 = vmax.f32 %v1052, %v1337
  %v1566 = vmax.f32 %v1053, %v1339
  %v1567 = vmax.f32 %v1054, %v1338
  %v1568 = vmax.f32 %v1055, %v1342
  %v1569 = vmax.f32 %v1056, %v1344
  %v1570 = vmax.f32 %v1057, %v1346
  %v1571 = vmax.f32 %v1058, %v1345
  %v1572 = vmax.f32 %v1059, %v1349
  %v1573 = vmax.f32 %v1060, %v1351
  %v1574 = vmax.f32 %v1061, %v1353
  %v1575 = vmax.f32 %v1062, %v1352
  %v1576 = vmax.f32 %v1063, %v1356
  %v1577 = vmax.f32 %v1064, %v1358
  %v1578 = vmax.f32 %v1065, %v1360
  %v1579 = vmax.f32 %v1066, %v1359
  %v1580 = vmax.f32 %v1067, %v1363
  %v1581 = vmax.f32 %v1068, %v1365
  %v1582 = vmax.f32 %v1069, %v1367
  %v1583 = vmax.f32 %v1070, %v1366
  %v1584 = vld [vmem:[%s3] sm:$0xff]
  %v1585 = vld [vmem:[%s3 + $0x8] sm:$0xff]
  %v1586 = vld [vmem:[%s3 + $0x10] sm:$0xff]
  %v1587 = vld [vmem:[%s3 + $0x18] sm:$0x7]
  %v1588 = vld [vmem:[%s3 + $0x20] sm:$0xff]
  %v1589 = vld [vmem:[%s3 + $0x28] sm:$0xff]
  %v1590 = vld [vmem:[%s3 + $0x30] sm:$0xff]
  %v1591 = vld [vmem:[%s3 + $0x38] sm:$0x7]
  %v1592 = vld [vmem:[%s3 + $0x40] sm:$0xff]
  %v1593 = vld [vmem:[%s3 + $0x48] sm:$0xff]
  %v1594 = vld [vmem:[%s3 + $0x50] sm:$0xff]
  %v1595 = vld [vmem:[%s3 + $0x58] sm:$0x7]
  %v1596 = vld [vmem:[%s3 + $0x60] sm:$0xff]
  %v1597 = vld [vmem:[%s3 + $0x68] sm:$0xff]
  %v1598 = vld [vmem:[%s3 + $0x70] sm:$0xff]
  %v1599 = vld [vmem:[%s3 + $0x78] sm:$0x7]
  %v1600 = vld [vmem:[%s3 + $0x80] sm:$0xff]
  %v1601 = vld [vmem:[%s3 + $0x88] sm:$0xff]
  %v1602 = vld [vmem:[%s3 + $0x90] sm:$0xff]
  %v1603 = vld [vmem:[%s3 + $0x98] sm:$0x7]
  %v1604 = vld [vmem:[%s3 + $0xa0] sm:$0xff]
  %v1605 = vld [vmem:[%s3 + $0xa8] sm:$0xff]
  %v1606 = vld [vmem:[%s3 + $0xb0] sm:$0xff]
  %v1607 = vld [vmem:[%s3 + $0xb8] sm:$0x7]
  %v1608 = vld [vmem:[%s3 + $0xc0] sm:$0xff]
  %v1609 = vld [vmem:[%s3 + $0xc8] sm:$0xff]
  %v1610 = vld [vmem:[%s3 + $0xd0] sm:$0xff]
  %v1611 = vld [vmem:[%s3 + $0xd8] sm:$0x7]
  %v1612 = vld [vmem:[%s3 + $0xe0] sm:$0xff]
  %v1613 = vld [vmem:[%s3 + $0xe8] sm:$0xff]
  %v1614 = vld [vmem:[%s3 + $0xf0] sm:$0xff]
  %v1615 = vld [vmem:[%s3 + $0xf8] sm:$0x7]
  %v1616 = vld [vmem:[%s3 + $0x100] sm:$0xff]
  %v1617 = vld [vmem:[%s3 + $0x108] sm:$0xff]
  %v1618 = vld [vmem:[%s3 + $0x110] sm:$0xff]
  %v1619 = vld [vmem:[%s3 + $0x118] sm:$0x7]
  %v1620 = vld [vmem:[%s3 + $0x120] sm:$0xff]
  %v1621 = vld [vmem:[%s3 + $0x128] sm:$0xff]
  %v1622 = vld [vmem:[%s3 + $0x130] sm:$0xff]
  %v1623 = vld [vmem:[%s3 + $0x138] sm:$0x7]
  %v1624 = vld [vmem:[%s3 + $0x140] sm:$0xff]
  %v1625 = vld [vmem:[%s3 + $0x148] sm:$0xff]
  %v1626 = vld [vmem:[%s3 + $0x150] sm:$0xff]
  %v1627 = vld [vmem:[%s3 + $0x158] sm:$0x7]
  %v1628 = vld [vmem:[%s3 + $0x160] sm:$0xff]
  %v1629 = vld [vmem:[%s3 + $0x168] sm:$0xff]
  %v1630 = vld [vmem:[%s3 + $0x170] sm:$0xff]
  %v1631 = vld [vmem:[%s3 + $0x178] sm:$0x7]
  %v1632 = vld [vmem:[%s3 + $0x180] sm:$0xff]
  %v1633 = vld [vmem:[%s3 + $0x188] sm:$0xff]
  %v1634 = vld [vmem:[%s3 + $0x190] sm:$0xff]
  %v1635 = vld [vmem:[%s3 + $0x198] sm:$0x7]
  %v1636 = vld [vmem:[%s3 + $0x1a0] sm:$0xff]
  %v1637 = vld [vmem:[%s3 + $0x1a8] sm:$0xff]
  %v1638 = vld [vmem:[%s3 + $0x1b0] sm:$0xff]
  %v1639 = vld [vmem:[%s3 + $0x1b8] sm:$0x7]
  %v1640 = vld [vmem:[%s3 + $0x1c0] sm:$0xff]
  %v1641 = vld [vmem:[%s3 + $0x1c8] sm:$0xff]
  %v1642 = vld [vmem:[%s3 + $0x1d0] sm:$0xff]
  %v1643 = vld [vmem:[%s3 + $0x1d8] sm:$0x7]
  %v1644 = vld [vmem:[%s3 + $0x1e0] sm:$0xff]
  %v1645 = vld [vmem:[%s3 + $0x1e8] sm:$0xff]
  %v1646 = vld [vmem:[%s3 + $0x1f0] sm:$0xff]
  %v1647 = vld [vmem:[%s3 + $0x1f8] sm:$0x7]
  %v1648 = vld [vmem:[%s3 + $0x200] sm:$0xff]
  %v1649 = vld [vmem:[%s3 + $0x208] sm:$0xff]
  %v1650 = vld [vmem:[%s3 + $0x210] sm:$0xff]
  %v1651 = vld [vmem:[%s3 + $0x218] sm:$0x7]
  %v1652 = vld [vmem:[%s3 + $0x220] sm:$0xff]
  %v1653 = vld [vmem:[%s3 + $0x228] sm:$0xff]
  %v1654 = vld [vmem:[%s3 + $0x230] sm:$0xff]
  %v1655 = vld [vmem:[%s3 + $0x238] sm:$0x7]
  %v1656 = vld [vmem:[%s3 + $0x240] sm:$0xff]
  %v1657 = vld [vmem:[%s3 + $0x248] sm:$0xff]
  %v1658 = vld [vmem:[%s3 + $0x250] sm:$0xff]
  %v1659 = vld [vmem:[%s3 + $0x258] sm:$0x7]
  %v1660 = vld [vmem:[%s3 + $0x260] sm:$0xff]
  %v1661 = vld [vmem:[%s3 + $0x268] sm:$0xff]
  %v1662 = vld [vmem:[%s3 + $0x270] sm:$0xff]
  %v1663 = vld [vmem:[%s3 + $0x278] sm:$0x7]
  %v1664 = vld [vmem:[%s3 + $0x280] sm:$0xff]
  %v1665 = vld [vmem:[%s3 + $0x288] sm:$0xff]
  %v1666 = vld [vmem:[%s3 + $0x290] sm:$0xff]
  %v1667 = vld [vmem:[%s3 + $0x298] sm:$0x7]
  %v1668 = vld [vmem:[%s3 + $0x2a0] sm:$0xff]
  %v1669 = vld [vmem:[%s3 + $0x2a8] sm:$0xff]
  %v1670 = vld [vmem:[%s3 + $0x2b0] sm:$0xff]
  %v1671 = vld [vmem:[%s3 + $0x2b8] sm:$0x7]
  %v1672 = vld [vmem:[%s3 + $0x2c0] sm:$0xff]
  %v1673 = vld [vmem:[%s3 + $0x2c8] sm:$0xff]
  %v1674 = vld [vmem:[%s3 + $0x2d0] sm:$0xff]
  %v1675 = vld [vmem:[%s3 + $0x2d8] sm:$0x7]
  %v1676 = vld [vmem:[%s3 + $0x2e0] sm:$0xff]
  %v1677 = vld [vmem:[%s3 + $0x2e8] sm:$0xff]
  %v1678 = vld [vmem:[%s3 + $0x2f0] sm:$0xff]
  %v1679 = vld [vmem:[%s3 + $0x2f8] sm:$0x7]
  %v1680 = vld [vmem:[%s3 + $0x300] sm:$0xff]
  %v1681 = vld [vmem:[%s3 + $0x308] sm:$0xff]
  %v1682 = vld [vmem:[%s3 + $0x310] sm:$0xff]
  %v1683 = vld [vmem:[%s3 + $0x318] sm:$0x7]
  %v1684 = vld [vmem:[%s3 + $0x320] sm:$0xff]
  %v1685 = vld [vmem:[%s3 + $0x328] sm:$0xff]
  %v1686 = vld [vmem:[%s3 + $0x330] sm:$0xff]
  %v1687 = vld [vmem:[%s3 + $0x338] sm:$0x7]
  %v1688 = vld [vmem:[%s3 + $0x340] sm:$0xff]
  %v1689 = vld [vmem:[%s3 + $0x348] sm:$0xff]
  %v1690 = vld [vmem:[%s3 + $0x350] sm:$0xff]
  %v1691 = vld [vmem:[%s3 + $0x358] sm:$0x7]
  %v1692 = vmax.f32 %v1476, %v1584
  %v1693 = vmax.f32 %v1477, %v1585
  %v1694 = vmax.f32 %v1478, %v1586
  %v1695 = vmax.f32 %v1479, %v1587
  %v1696 = vmax.f32 %v1480, %v1588
  %v1697 = vmax.f32 %v1481, %v1589
  %v1698 = vmax.f32 %v1482, %v1590
  %v1699 = vmax.f32 %v1483, %v1591
  %v1700 = vmax.f32 %v1484, %v1592
  %v1701 = vmax.f32 %v1485, %v1593
  %v1702 = vmax.f32 %v1486, %v1594
  %v1703 = vmax.f32 %v1487, %v1595
  %v1704 = vmax.f32 %v1488, %v1596
  %v1705 = vmax.f32 %v1489, %v1597
  %v1706 = vmax.f32 %v1490, %v1598
  %v1707 = vmax.f32 %v1491, %v1599
  %v1708 = vmax.f32 %v1492, %v1600
  %v1709 = vmax.f32 %v1493, %v1601
  %v1710 = vmax.f32 %v1494, %v1602
  %v1711 = vmax.f32 %v1495, %v1603
  %v1712 = vmax.f32 %v1496, %v1604
  %v1713 = vmax.f32 %v1497, %v1605
  %v1714 = vmax.f32 %v1498, %v1606
  %v1715 = vmax.f32 %v1499, %v1607
  %v1716 = vmax.f32 %v1500, %v1608
  %v1717 = vmax.f32 %v1501, %v1609
  %v1718 = vmax.f32 %v1502, %v1610
  %v1719 = vmax.f32 %v1503, %v1611
  %v1720 = vmax.f32 %v1504, %v1612
  %v1721 = vmax.f32 %v1505, %v1613
  %v1722 = vmax.f32 %v1506, %v1614
  %v1723 = vmax.f32 %v1507, %v1615
  %v1724 = vmax.f32 %v1508, %v1616
  %v1725 = vmax.f32 %v1509, %v1617
  %v1726 = vmax.f32 %v1510, %v1618
  %v1727 = vmax.f32 %v1511, %v1619
  %v1728 = vmax.f32 %v1512, %v1620
  %v1729 = vmax.f32 %v1513, %v1621
  %v1730 = vmax.f32 %v1514, %v1622
  %v1731 = vmax.f32 %v1515, %v1623
  %v1732 = vmax.f32 %v1516, %v1624
  %v1733 = vmax.f32 %v1517, %v1625
  %v1734 = vmax.f32 %v1518, %v1626
  %v1735 = vmax.f32 %v1519, %v1627
  %v1736 = vmax.f32 %v1520, %v1628
  %v1737 = vmax.f32 %v1521, %v1629
  %v1738 = vmax.f32 %v1522, %v1630
  %v1739 = vmax.f32 %v1523, %v1631
  %v1740 = vmax.f32 %v1524, %v1632
  %v1741 = vmax.f32 %v1525, %v1633
  %v1742 = vmax.f32 %v1526, %v1634
  %v1743 = vmax.f32 %v1527, %v1635
  %v1744 = vmax.f32 %v1528, %v1636
  %v1745 = vmax.f32 %v1529, %v1637
  %v1746 = vmax.f32 %v1530, %v1638
  %v1747 = vmax.f32 %v1531, %v1639
  %v1748 = vmax.f32 %v1532, %v1640
  %v1749 = vmax.f32 %v1533, %v1641
  %v1750 = vmax.f32 %v1534, %v1642
  %v1751 = vmax.f32 %v1535, %v1643
  %v1752 = vmax.f32 %v1536, %v1644
  %v1753 = vmax.f32 %v1537, %v1645
  %v1754 = vmax.f32 %v1538, %v1646
  %v1755 = vmax.f32 %v1539, %v1647
  %v1756 = vmax.f32 %v1540, %v1648
  %v1757 = vmax.f32 %v1541, %v1649
  %v1758 = vmax.f32 %v1542, %v1650
  %v1759 = vmax.f32 %v1543, %v1651
  %v1760 = vmax.f32 %v1544, %v1652
  %v1761 = vmax.f32 %v1545, %v1653
  %v1762 = vmax.f32 %v1546, %v1654
  %v1763 = vmax.f32 %v1547, %v1655
  %v1764 = vmax.f32 %v1548, %v1656
  %v1765 = vmax.f32 %v1549, %v1657
  %v1766 = vmax.f32 %v1550, %v1658
  %v1767 = vmax.f32 %v1551, %v1659
  %v1768 = vmax.f32 %v1552, %v1660
  %v1769 = vmax.f32 %v1553, %v1661
  %v1770 = vmax.f32 %v1554, %v1662
  %v1771 = vmax.f32 %v1555, %v1663
  %v1772 = vmax.f32 %v1556, %v1664
  %v1773 = vmax.f32 %v1557, %v1665
  %v1774 = vmax.f32 %v1558, %v1666
  %v1775 = vmax.f32 %v1559, %v1667
  %v1776 = vmax.f32 %v1560, %v1668
  %v1777 = vmax.f32 %v1561, %v1669
  %v1778 = vmax.f32 %v1562, %v1670
  %v1779 = vmax.f32 %v1563, %v1671
  %v1780 = vmax.f32 %v1564, %v1672
  %v1781 = vmax.f32 %v1565, %v1673
  %v1782 = vmax.f32 %v1566, %v1674
  %v1783 = vmax.f32 %v1567, %v1675
  %v1784 = vmax.f32 %v1568, %v1676
  %v1785 = vmax.f32 %v1569, %v1677
  %v1786 = vmax.f32 %v1570, %v1678
  %v1787 = vmax.f32 %v1571, %v1679
  %v1788 = vmax.f32 %v1572, %v1680
  %v1789 = vmax.f32 %v1573, %v1681
  %v1790 = vmax.f32 %v1574, %v1682
  %v1791 = vmax.f32 %v1575, %v1683
  %v1792 = vmax.f32 %v1576, %v1684
  %v1793 = vmax.f32 %v1577, %v1685
  %v1794 = vmax.f32 %v1578, %v1686
  %v1795 = vmax.f32 %v1579, %v1687
  %v1796 = vmax.f32 %v1580, %v1688
  %v1797 = vmax.f32 %v1581, %v1689
  %v1798 = vmax.f32 %v1582, %v1690
  %v1799 = vmax.f32 %v1583, %v1691
  %s1800 = scalar_lea.vmem %s0, 32
  %v1801 = vld [vmem:[%s1800] sm:$0xff]
  %v1802 = vld [vmem:[%s1800 + $0x8] sm:$0xff]
  %v1803 = vld [vmem:[%s1800 + $0x10] sm:$0xff]
  %v1804 = vld [vmem:[%s1800 + $0x18] sm:$0xf]
  %v1805 = vld [vmem:[%s1800 + $0x20] sm:$0xff]
  %v1806 = vld [vmem:[%s1800 + $0x28] sm:$0xff]
  %v1807 = vld [vmem:[%s1800 + $0x30] sm:$0xff]
  %v1808 = vld [vmem:[%s1800 + $0x38] sm:$0xf]
  %v1809 = vld [vmem:[%s1800 + $0x40] sm:$0xff]
  %v1810 = vld [vmem:[%s1800 + $0x48] sm:$0xff]
  %v1811 = vld [vmem:[%s1800 + $0x50] sm:$0xff]
  %v1812 = vld [vmem:[%s1800 + $0x58] sm:$0xf]
  %v1813 = vld [vmem:[%s1800 + $0x60] sm:$0xff]
  %v1814 = vld [vmem:[%s1800 + $0x68] sm:$0xff]
  %v1815 = vld [vmem:[%s1800 + $0x70] sm:$0xff]
  %v1816 = vld [vmem:[%s1800 + $0x78] sm:$0xf]
  %v1817 = vld [vmem:[%s1800 + $0x80] sm:$0xff]
  %v1818 = vld [vmem:[%s1800 + $0x88] sm:$0xff]
  %v1819 = vld [vmem:[%s1800 + $0x90] sm:$0xff]
  %v1820 = vld [vmem:[%s1800 + $0x98] sm:$0xf]
  %v1821 = vld [vmem:[%s1800 + $0xa0] sm:$0xff]
  %v1822 = vld [vmem:[%s1800 + $0xa8] sm:$0xff]
  %v1823 = vld [vmem:[%s1800 + $0xb0] sm:$0xff]
  %v1824 = vld [vmem:[%s1800 + $0xb8] sm:$0xf]
  %v1825 = vld [vmem:[%s1800 + $0xc0] sm:$0xff]
  %v1826 = vld [vmem:[%s1800 + $0xc8] sm:$0xff]
  %v1827 = vld [vmem:[%s1800 + $0xd0] sm:$0xff]
  %v1828 = vld [vmem:[%s1800 + $0xd8] sm:$0xf]
  %v1829 = vld [vmem:[%s1800 + $0xe0] sm:$0xff]
  %v1830 = vld [vmem:[%s1800 + $0xe8] sm:$0xff]
  %v1831 = vld [vmem:[%s1800 + $0xf0] sm:$0xff]
  %v1832 = vld [vmem:[%s1800 + $0xf8] sm:$0xf]
  %v1833 = vld [vmem:[%s1800 + $0x100] sm:$0xff]
  %v1834 = vld [vmem:[%s1800 + $0x108] sm:$0xff]
  %v1835 = vld [vmem:[%s1800 + $0x110] sm:$0xff]
  %v1836 = vld [vmem:[%s1800 + $0x118] sm:$0xf]
  %v1837 = vld [vmem:[%s1800 + $0x120] sm:$0xff]
  %v1838 = vld [vmem:[%s1800 + $0x128] sm:$0xff]
  %v1839 = vld [vmem:[%s1800 + $0x130] sm:$0xff]
  %v1840 = vld [vmem:[%s1800 + $0x138] sm:$0xf]
  %v1841 = vld [vmem:[%s1800 + $0x140] sm:$0xff]
  %v1842 = vld [vmem:[%s1800 + $0x148] sm:$0xff]
  %v1843 = vld [vmem:[%s1800 + $0x150] sm:$0xff]
  %v1844 = vld [vmem:[%s1800 + $0x158] sm:$0xf]
  %v1845 = vld [vmem:[%s1800 + $0x160] sm:$0xff]
  %v1846 = vld [vmem:[%s1800 + $0x168] sm:$0xff]
  %v1847 = vld [vmem:[%s1800 + $0x170] sm:$0xff]
  %v1848 = vld [vmem:[%s1800 + $0x178] sm:$0xf]
  %v1849 = vld [vmem:[%s1800 + $0x180] sm:$0xff]
  %v1850 = vld [vmem:[%s1800 + $0x188] sm:$0xff]
  %v1851 = vld [vmem:[%s1800 + $0x190] sm:$0xff]
  %v1852 = vld [vmem:[%s1800 + $0x198] sm:$0xf]
  %v1853 = vld [vmem:[%s1800 + $0x1a0] sm:$0xff]
  %v1854 = vld [vmem:[%s1800 + $0x1a8] sm:$0xff]
  %v1855 = vld [vmem:[%s1800 + $0x1b0] sm:$0xff]
  %v1856 = vld [vmem:[%s1800 + $0x1b8] sm:$0xf]
  %v1857 = vld [vmem:[%s1800 + $0x1c0] sm:$0xff]
  %v1858 = vld [vmem:[%s1800 + $0x1c8] sm:$0xff]
  %v1859 = vld [vmem:[%s1800 + $0x1d0] sm:$0xff]
  %v1860 = vld [vmem:[%s1800 + $0x1d8] sm:$0xf]
  %v1861 = vld [vmem:[%s1800 + $0x1e0] sm:$0xff]
  %v1862 = vld [vmem:[%s1800 + $0x1e8] sm:$0xff]
  %v1863 = vld [vmem:[%s1800 + $0x1f0] sm:$0xff]
  %v1864 = vld [vmem:[%s1800 + $0x1f8] sm:$0xf]
  %v1865 = vld [vmem:[%s1800 + $0x200] sm:$0xff]
  %v1866 = vld [vmem:[%s1800 + $0x208] sm:$0xff]
  %v1867 = vld [vmem:[%s1800 + $0x210] sm:$0xff]
  %v1868 = vld [vmem:[%s1800 + $0x218] sm:$0xf]
  %v1869 = vld [vmem:[%s1800 + $0x220] sm:$0xff]
  %v1870 = vld [vmem:[%s1800 + $0x228] sm:$0xff]
  %v1871 = vld [vmem:[%s1800 + $0x230] sm:$0xff]
  %v1872 = vld [vmem:[%s1800 + $0x238] sm:$0xf]
  %v1873 = vld [vmem:[%s1800 + $0x240] sm:$0xff]
  %v1874 = vld [vmem:[%s1800 + $0x248] sm:$0xff]
  %v1875 = vld [vmem:[%s1800 + $0x250] sm:$0xff]
  %v1876 = vld [vmem:[%s1800 + $0x258] sm:$0xf]
  %v1877 = vld [vmem:[%s1800 + $0x260] sm:$0xff]
  %v1878 = vld [vmem:[%s1800 + $0x268] sm:$0xff]
  %v1879 = vld [vmem:[%s1800 + $0x270] sm:$0xff]
  %v1880 = vld [vmem:[%s1800 + $0x278] sm:$0xf]
  %v1881 = vld [vmem:[%s1800 + $0x280] sm:$0xff]
  %v1882 = vld [vmem:[%s1800 + $0x288] sm:$0xff]
  %v1883 = vld [vmem:[%s1800 + $0x290] sm:$0xff]
  %v1884 = vld [vmem:[%s1800 + $0x298] sm:$0xf]
  %v1885 = vld [vmem:[%s1800 + $0x2a0] sm:$0xff]
  %v1886 = vld [vmem:[%s1800 + $0x2a8] sm:$0xff]
  %v1887 = vld [vmem:[%s1800 + $0x2b0] sm:$0xff]
  %v1888 = vld [vmem:[%s1800 + $0x2b8] sm:$0xf]
  %v1889 = vld [vmem:[%s1800 + $0x2c0] sm:$0xff]
  %v1890 = vld [vmem:[%s1800 + $0x2c8] sm:$0xff]
  %v1891 = vld [vmem:[%s1800 + $0x2d0] sm:$0xff]
  %v1892 = vld [vmem:[%s1800 + $0x2d8] sm:$0xf]
  %v1893 = vld [vmem:[%s1800 + $0x2e0] sm:$0xff]
  %v1894 = vld [vmem:[%s1800 + $0x2e8] sm:$0xff]
  %v1895 = vld [vmem:[%s1800 + $0x2f0] sm:$0xff]
  %v1896 = vld [vmem:[%s1800 + $0x2f8] sm:$0xf]
  %v1897 = vld [vmem:[%s1800 + $0x300] sm:$0xff]
  %v1898 = vld [vmem:[%s1800 + $0x308] sm:$0xff]
  %v1899 = vld [vmem:[%s1800 + $0x310] sm:$0xff]
  %v1900 = vld [vmem:[%s1800 + $0x318] sm:$0xf]
  %v1901 = vld [vmem:[%s1800 + $0x320] sm:$0xff]
  %v1902 = vld [vmem:[%s1800 + $0x328] sm:$0xff]
  %v1903 = vld [vmem:[%s1800 + $0x330] sm:$0xff]
  %v1904 = vld [vmem:[%s1800 + $0x338] sm:$0xf]
  %v1905 = vld [vmem:[%s1800 + $0x340] sm:$0xff]
  %v1906 = vld [vmem:[%s1800 + $0x348] sm:$0xff]
  %v1907 = vld [vmem:[%s1800 + $0x350] sm:$0xff]
  %v1908 = vld [vmem:[%s1800 + $0x358] sm:$0xf]
  %v1909 = vmax.f32 %v1692, %v1801
  %v1910 = vmax.f32 %v1693, %v1802
  %v1911 = vmax.f32 %v1694, %v1803
  %v1912 = vmax.f32 %v1695, %v1804
  %v1913 = vmax.f32 %v1696, %v1805
  %v1914 = vmax.f32 %v1697, %v1806
  %v1915 = vmax.f32 %v1698, %v1807
  %v1916 = vmax.f32 %v1699, %v1808
  %v1917 = vmax.f32 %v1700, %v1809
  %v1918 = vmax.f32 %v1701, %v1810
  %v1919 = vmax.f32 %v1702, %v1811
  %v1920 = vmax.f32 %v1703, %v1812
  %v1921 = vmax.f32 %v1704, %v1813
  %v1922 = vmax.f32 %v1705, %v1814
  %v1923 = vmax.f32 %v1706, %v1815
  %v1924 = vmax.f32 %v1707, %v1816
  %v1925 = vmax.f32 %v1708, %v1817
  %v1926 = vmax.f32 %v1709, %v1818
  %v1927 = vmax.f32 %v1710, %v1819
  %v1928 = vmax.f32 %v1711, %v1820
  %v1929 = vmax.f32 %v1712, %v1821
  %v1930 = vmax.f32 %v1713, %v1822
  %v1931 = vmax.f32 %v1714, %v1823
  %v1932 = vmax.f32 %v1715, %v1824
  %v1933 = vmax.f32 %v1716, %v1825
  %v1934 = vmax.f32 %v1717, %v1826
  %v1935 = vmax.f32 %v1718, %v1827
  %v1936 = vmax.f32 %v1719, %v1828
  %v1937 = vmax.f32 %v1720, %v1829
  %v1938 = vmax.f32 %v1721, %v1830
  %v1939 = vmax.f32 %v1722, %v1831
  %v1940 = vmax.f32 %v1723, %v1832
  %v1941 = vmax.f32 %v1724, %v1833
  %v1942 = vmax.f32 %v1725, %v1834
  %v1943 = vmax.f32 %v1726, %v1835
  %v1944 = vmax.f32 %v1727, %v1836
  %v1945 = vmax.f32 %v1728, %v1837
  %v1946 = vmax.f32 %v1729, %v1838
  %v1947 = vmax.f32 %v1730, %v1839
  %v1948 = vmax.f32 %v1731, %v1840
  %v1949 = vmax.f32 %v1732, %v1841
  %v1950 = vmax.f32 %v1733, %v1842
  %v1951 = vmax.f32 %v1734, %v1843
  %v1952 = vmax.f32 %v1735, %v1844
  %v1953 = vmax.f32 %v1736, %v1845
  %v1954 = vmax.f32 %v1737, %v1846
  %v1955 = vmax.f32 %v1738, %v1847
  %v1956 = vmax.f32 %v1739, %v1848
  %v1957 = vmax.f32 %v1740, %v1849
  %v1958 = vmax.f32 %v1741, %v1850
  %v1959 = vmax.f32 %v1742, %v1851
  %v1960 = vmax.f32 %v1743, %v1852
  %v1961 = vmax.f32 %v1744, %v1853
  %v1962 = vmax.f32 %v1745, %v1854
  %v1963 = vmax.f32 %v1746, %v1855
  %v1964 = vmax.f32 %v1747, %v1856
  %v1965 = vmax.f32 %v1748, %v1857
  %v1966 = vmax.f32 %v1749, %v1858
  %v1967 = vmax.f32 %v1750, %v1859
  %v1968 = vmax.f32 %v1751, %v1860
  %v1969 = vmax.f32 %v1752, %v1861
  %v1970 = vmax.f32 %v1753, %v1862
  %v1971 = vmax.f32 %v1754, %v1863
  %v1972 = vmax.f32 %v1755, %v1864
  %v1973 = vmax.f32 %v1756, %v1865
  %v1974 = vmax.f32 %v1757, %v1866
  %v1975 = vmax.f32 %v1758, %v1867
  %v1976 = vmax.f32 %v1759, %v1868
  %v1977 = vmax.f32 %v1760, %v1869
  %v1978 = vmax.f32 %v1761, %v1870
  %v1979 = vmax.f32 %v1762, %v1871
  %v1980 = vmax.f32 %v1763, %v1872
  %v1981 = vmax.f32 %v1764, %v1873
  %v1982 = vmax.f32 %v1765, %v1874
  %v1983 = vmax.f32 %v1766, %v1875
  %v1984 = vmax.f32 %v1767, %v1876
  %v1985 = vmax.f32 %v1768, %v1877
  %v1986 = vmax.f32 %v1769, %v1878
  %v1987 = vmax.f32 %v1770, %v1879
  %v1988 = vmax.f32 %v1771, %v1880
  %v1989 = vmax.f32 %v1772, %v1881
  %v1990 = vmax.f32 %v1773, %v1882
  %v1991 = vmax.f32 %v1774, %v1883
  %v1992 = vmax.f32 %v1775, %v1884
  %v1993 = vmax.f32 %v1776, %v1885
  %v1994 = vmax.f32 %v1777, %v1886
  %v1995 = vmax.f32 %v1778, %v1887
  %v1996 = vmax.f32 %v1779, %v1888
  %v1997 = vmax.f32 %v1780, %v1889
  %v1998 = vmax.f32 %v1781, %v1890
  %v1999 = vmax.f32 %v1782, %v1891
  %v2000 = vmax.f32 %v1783, %v1892
  %v2001 = vmax.f32 %v1784, %v1893
  %v2002 = vmax.f32 %v1785, %v1894
  %v2003 = vmax.f32 %v1786, %v1895
  %v2004 = vmax.f32 %v1787, %v1896
  %v2005 = vmax.f32 %v1788, %v1897
  %v2006 = vmax.f32 %v1789, %v1898
  %v2007 = vmax.f32 %v1790, %v1899
  %v2008 = vmax.f32 %v1791, %v1900
  %v2009 = vmax.f32 %v1792, %v1901
  %v2010 = vmax.f32 %v1793, %v1902
  %v2011 = vmax.f32 %v1794, %v1903
  %v2012 = vmax.f32 %v1795, %v1904
  %v2013 = vmax.f32 %v1796, %v1905
  %v2014 = vmax.f32 %v1797, %v1906
  %v2015 = vmax.f32 %v1798, %v1907
  %v2016 = vmax.f32 %v1799, %v1908
  %v2125 = vrot.slane %v1801, 1
  %v2126 = vrot.slane %v1802, 1
  %v2127 = vsel %vm233, %v2125, %v2126
  %v2128 = vrot.slane %v1803, 1
  %v2129 = vsel %vm233, %v2126, %v2128
  %v2130 = vrot.slane %v1804, 1
  %v2131 = vsel %vm233, %v2128, %v2130
  %v2132 = vrot.slane %v1805, 1
  %v2133 = vrot.slane %v1806, 1
  %v2134 = vsel %vm233, %v2132, %v2133
  %v2135 = vrot.slane %v1807, 1
  %v2136 = vsel %vm233, %v2133, %v2135
  %v2137 = vrot.slane %v1808, 1
  %v2138 = vsel %vm233, %v2135, %v2137
  %v2139 = vrot.slane %v1809, 1
  %v2140 = vrot.slane %v1810, 1
  %v2141 = vsel %vm233, %v2139, %v2140
  %v2142 = vrot.slane %v1811, 1
  %v2143 = vsel %vm233, %v2140, %v2142
  %v2144 = vrot.slane %v1812, 1
  %v2145 = vsel %vm233, %v2142, %v2144
  %v2146 = vrot.slane %v1813, 1
  %v2147 = vrot.slane %v1814, 1
  %v2148 = vsel %vm233, %v2146, %v2147
  %v2149 = vrot.slane %v1815, 1
  %v2150 = vsel %vm233, %v2147, %v2149
  %v2151 = vrot.slane %v1816, 1
  %v2152 = vsel %vm233, %v2149, %v2151
  %v2153 = vrot.slane %v1817, 1
  %v2154 = vrot.slane %v1818, 1
  %v2155 = vsel %vm233, %v2153, %v2154
  %v2156 = vrot.slane %v1819, 1
  %v2157 = vsel %vm233, %v2154, %v2156
  %v2158 = vrot.slane %v1820, 1
  %v2159 = vsel %vm233, %v2156, %v2158
  %v2160 = vrot.slane %v1821, 1
  %v2161 = vrot.slane %v1822, 1
  %v2162 = vsel %vm233, %v2160, %v2161
  %v2163 = vrot.slane %v1823, 1
  %v2164 = vsel %vm233, %v2161, %v2163
  %v2165 = vrot.slane %v1824, 1
  %v2166 = vsel %vm233, %v2163, %v2165
  %v2167 = vrot.slane %v1825, 1
  %v2168 = vrot.slane %v1826, 1
  %v2169 = vsel %vm233, %v2167, %v2168
  %v2170 = vrot.slane %v1827, 1
  %v2171 = vsel %vm233, %v2168, %v2170
  %v2172 = vrot.slane %v1828, 1
  %v2173 = vsel %vm233, %v2170, %v2172
  %v2174 = vrot.slane %v1829, 1
  %v2175 = vrot.slane %v1830, 1
  %v2176 = vsel %vm233, %v2174, %v2175
  %v2177 = vrot.slane %v1831, 1
  %v2178 = vsel %vm233, %v2175, %v2177
  %v2179 = vrot.slane %v1832, 1
  %v2180 = vsel %vm233, %v2177, %v2179
  %v2181 = vrot.slane %v1833, 1
  %v2182 = vrot.slane %v1834, 1
  %v2183 = vsel %vm233, %v2181, %v2182
  %v2184 = vrot.slane %v1835, 1
  %v2185 = vsel %vm233, %v2182, %v2184
  %v2186 = vrot.slane %v1836, 1
  %v2187 = vsel %vm233, %v2184, %v2186
  %v2188 = vrot.slane %v1837, 1
  %v2189 = vrot.slane %v1838, 1
  %v2190 = vsel %vm233, %v2188, %v2189
  %v2191 = vrot.slane %v1839, 1
  %v2192 = vsel %vm233, %v2189, %v2191
  %v2193 = vrot.slane %v1840, 1
  %v2194 = vsel %vm233, %v2191, %v2193
  %v2195 = vrot.slane %v1841, 1
  %v2196 = vrot.slane %v1842, 1
  %v2197 = vsel %vm233, %v2195, %v2196
  %v2198 = vrot.slane %v1843, 1
  %v2199 = vsel %vm233, %v2196, %v2198
  %v2200 = vrot.slane %v1844, 1
  %v2201 = vsel %vm233, %v2198, %v2200
  %v2202 = vrot.slane %v1845, 1
  %v2203 = vrot.slane %v1846, 1
  %v2204 = vsel %vm233, %v2202, %v2203
  %v2205 = vrot.slane %v1847, 1
  %v2206 = vsel %vm233, %v2203, %v2205
  %v2207 = vrot.slane %v1848, 1
  %v2208 = vsel %vm233, %v2205, %v2207
  %v2209 = vrot.slane %v1849, 1
  %v2210 = vrot.slane %v1850, 1
  %v2211 = vsel %vm233, %v2209, %v2210
  %v2212 = vrot.slane %v1851, 1
  %v2213 = vsel %vm233, %v2210, %v2212
  %v2214 = vrot.slane %v1852, 1
  %v2215 = vsel %vm233, %v2212, %v2214
  %v2216 = vrot.slane %v1853, 1
  %v2217 = vrot.slane %v1854, 1
  %v2218 = vsel %vm233, %v2216, %v2217
  %v2219 = vrot.slane %v1855, 1
  %v2220 = vsel %vm233, %v2217, %v2219
  %v2221 = vrot.slane %v1856, 1
  %v2222 = vsel %vm233, %v2219, %v2221
  %v2223 = vrot.slane %v1857, 1
  %v2224 = vrot.slane %v1858, 1
  %v2225 = vsel %vm233, %v2223, %v2224
  %v2226 = vrot.slane %v1859, 1
  %v2227 = vsel %vm233, %v2224, %v2226
  %v2228 = vrot.slane %v1860, 1
  %v2229 = vsel %vm233, %v2226, %v2228
  %v2230 = vrot.slane %v1861, 1
  %v2231 = vrot.slane %v1862, 1
  %v2232 = vsel %vm233, %v2230, %v2231
  %v2233 = vrot.slane %v1863, 1
  %v2234 = vsel %vm233, %v2231, %v2233
  %v2235 = vrot.slane %v1864, 1
  %v2236 = vsel %vm233, %v2233, %v2235
  %v2237 = vrot.slane %v1865, 1
  %v2238 = vrot.slane %v1866, 1
  %v2239 = vsel %vm233, %v2237, %v2238
  %v2240 = vrot.slane %v1867, 1
  %v2241 = vsel %vm233, %v2238, %v2240
  %v2242 = vrot.slane %v1868, 1
  %v2243 = vsel %vm233, %v2240, %v2242
  %v2244 = vrot.slane %v1869, 1
  %v2245 = vrot.slane %v1870, 1
  %v2246 = vsel %vm233, %v2244, %v2245
  %v2247 = vrot.slane %v1871, 1
  %v2248 = vsel %vm233, %v2245, %v2247
  %v2249 = vrot.slane %v1872, 1
  %v2250 = vsel %vm233, %v2247, %v2249
  %v2251 = vrot.slane %v1873, 1
  %v2252 = vrot.slane %v1874, 1
  %v2253 = vsel %vm233, %v2251, %v2252
  %v2254 = vrot.slane %v1875, 1
  %v2255 = vsel %vm233, %v2252, %v2254
  %v2256 = vrot.slane %v1876, 1
  %v2257 = vsel %vm233, %v2254, %v2256
  %v2258 = vrot.slane %v1877, 1
  %v2259 = vrot.slane %v1878, 1
  %v2260 = vsel %vm233, %v2258, %v2259
  %v2261 = vrot.slane %v1879, 1
  %v2262 = vsel %vm233, %v2259, %v2261
  %v2263 = vrot.slane %v1880, 1
  %v2264 = vsel %vm233, %v2261, %v2263
  %v2265 = vrot.slane %v1881, 1
  %v2266 = vrot.slane %v1882, 1
  %v2267 = vsel %vm233, %v2265, %v2266
  %v2268 = vrot.slane %v1883, 1
  %v2269 = vsel %vm233, %v2266, %v2268
  %v2270 = vrot.slane %v1884, 1
  %v2271 = vsel %vm233, %v2268, %v2270
  %v2272 = vrot.slane %v1885, 1
  %v2273 = vrot.slane %v1886, 1
  %v2274 = vsel %vm233, %v2272, %v2273
  %v2275 = vrot.slane %v1887, 1
  %v2276 = vsel %vm233, %v2273, %v2275
  %v2277 = vrot.slane %v1888, 1
  %v2278 = vsel %vm233, %v2275, %v2277
  %v2279 = vrot.slane %v1889, 1
  %v2280 = vrot.slane %v1890, 1
  %v2281 = vsel %vm233, %v2279, %v2280
  %v2282 = vrot.slane %v1891, 1
  %v2283 = vsel %vm233, %v2280, %v2282
  %v2284 = vrot.slane %v1892, 1
  %v2285 = vsel %vm233, %v2282, %v2284
  %v2286 = vrot.slane %v1893, 1
  %v2287 = vrot.slane %v1894, 1
  %v2288 = vsel %vm233, %v2286, %v2287
  %v2289 = vrot.slane %v1895, 1
  %v2290 = vsel %vm233, %v2287, %v2289
  %v2291 = vrot.slane %v1896, 1
  %v2292 = vsel %vm233, %v2289, %v2291
  %v2293 = vrot.slane %v1897, 1
  %v2294 = vrot.slane %v1898, 1
  %v2295 = vsel %vm233, %v2293, %v2294
  %v2296 = vrot.slane %v1899, 1
  %v2297 = vsel %vm233, %v2294, %v2296
  %v2298 = vrot.slane %v1900, 1
  %v2299 = vsel %vm233, %v2296, %v2298
  %v2300 = vrot.slane %v1901, 1
  %v2301 = vrot.slane %v1902, 1
  %v2302 = vsel %vm233, %v2300, %v2301
  %v2303 = vrot.slane %v1903, 1
  %v2304 = vsel %vm233, %v2301, %v2303
  %v2305 = vrot.slane %v1904, 1
  %v2306 = vsel %vm233, %v2303, %v2305
  %v2307 = vrot.slane %v1905, 1
  %v2308 = vrot.slane %v1906, 1
  %v2309 = vsel %vm233, %v2307, %v2308
  %v2310 = vrot.slane %v1907, 1
  %v2311 = vsel %vm233, %v2308, %v2310
  %v2312 = vrot.slane %v1908, 1
  %v2313 = vsel %vm233, %v2310, %v2312
  %v2422 = vmax.f32 %v1909, %v2127
  %v2423 = vmax.f32 %v1910, %v2129
  %v2424 = vmax.f32 %v1911, %v2131
  %v2425 = vmax.f32 %v1912, %v2130
  %v2426 = vmax.f32 %v1913, %v2134
  %v2427 = vmax.f32 %v1914, %v2136
  %v2428 = vmax.f32 %v1915, %v2138
  %v2429 = vmax.f32 %v1916, %v2137
  %v2430 = vmax.f32 %v1917, %v2141
  %v2431 = vmax.f32 %v1918, %v2143
  %v2432 = vmax.f32 %v1919, %v2145
  %v2433 = vmax.f32 %v1920, %v2144
  %v2434 = vmax.f32 %v1921, %v2148
  %v2435 = vmax.f32 %v1922, %v2150
  %v2436 = vmax.f32 %v1923, %v2152
  %v2437 = vmax.f32 %v1924, %v2151
  %v2438 = vmax.f32 %v1925, %v2155
  %v2439 = vmax.f32 %v1926, %v2157
  %v2440 = vmax.f32 %v1927, %v2159
  %v2441 = vmax.f32 %v1928, %v2158
  %v2442 = vmax.f32 %v1929, %v2162
  %v2443 = vmax.f32 %v1930, %v2164
  %v2444 = vmax.f32 %v1931, %v2166
  %v2445 = vmax.f32 %v1932, %v2165
  %v2446 = vmax.f32 %v1933, %v2169
  %v2447 = vmax.f32 %v1934, %v2171
  %v2448 = vmax.f32 %v1935, %v2173
  %v2449 = vmax.f32 %v1936, %v2172
  %v2450 = vmax.f32 %v1937, %v2176
  %v2451 = vmax.f32 %v1938, %v2178
  %v2452 = vmax.f32 %v1939, %v2180
  %v2453 = vmax.f32 %v1940, %v2179
  %v2454 = vmax.f32 %v1941, %v2183
  %v2455 = vmax.f32 %v1942, %v2185
  %v2456 = vmax.f32 %v1943, %v2187
  %v2457 = vmax.f32 %v1944, %v2186
  %v2458 = vmax.f32 %v1945, %v2190
  %v2459 = vmax.f32 %v1946, %v2192
  %v2460 = vmax.f32 %v1947, %v2194
  %v2461 = vmax.f32 %v1948, %v2193
  %v2462 = vmax.f32 %v1949, %v2197
  %v2463 = vmax.f32 %v1950, %v2199
  %v2464 = vmax.f32 %v1951, %v2201
  %v2465 = vmax.f32 %v1952, %v2200
  %v2466 = vmax.f32 %v1953, %v2204
  %v2467 = vmax.f32 %v1954, %v2206
  %v2468 = vmax.f32 %v1955, %v2208
  %v2469 = vmax.f32 %v1956, %v2207
  %v2470 = vmax.f32 %v1957, %v2211
  %v2471 = vmax.f32 %v1958, %v2213
  %v2472 = vmax.f32 %v1959, %v2215
  %v2473 = vmax.f32 %v1960, %v2214
  %v2474 = vmax.f32 %v1961, %v2218
  %v2475 = vmax.f32 %v1962, %v2220
  %v2476 = vmax.f32 %v1963, %v2222
  %v2477 = vmax.f32 %v1964, %v2221
  %v2478 = vmax.f32 %v1965, %v2225
  %v2479 = vmax.f32 %v1966, %v2227
  %v2480 = vmax.f32 %v1967, %v2229
  %v2481 = vmax.f32 %v1968, %v2228
  %v2482 = vmax.f32 %v1969, %v2232
  %v2483 = vmax.f32 %v1970, %v2234
  %v2484 = vmax.f32 %v1971, %v2236
  %v2485 = vmax.f32 %v1972, %v2235
  %v2486 = vmax.f32 %v1973, %v2239
  %v2487 = vmax.f32 %v1974, %v2241
  %v2488 = vmax.f32 %v1975, %v2243
  %v2489 = vmax.f32 %v1976, %v2242
  %v2490 = vmax.f32 %v1977, %v2246
  %v2491 = vmax.f32 %v1978, %v2248
  %v2492 = vmax.f32 %v1979, %v2250
  %v2493 = vmax.f32 %v1980, %v2249
  %v2494 = vmax.f32 %v1981, %v2253
  %v2495 = vmax.f32 %v1982, %v2255
  %v2496 = vmax.f32 %v1983, %v2257
  %v2497 = vmax.f32 %v1984, %v2256
  %v2498 = vmax.f32 %v1985, %v2260
  %v2499 = vmax.f32 %v1986, %v2262
  %v2500 = vmax.f32 %v1987, %v2264
  %v2501 = vmax.f32 %v1988, %v2263
  %v2502 = vmax.f32 %v1989, %v2267
  %v2503 = vmax.f32 %v1990, %v2269
  %v2504 = vmax.f32 %v1991, %v2271
  %v2505 = vmax.f32 %v1992, %v2270
  %v2506 = vmax.f32 %v1993, %v2274
  %v2507 = vmax.f32 %v1994, %v2276
  %v2508 = vmax.f32 %v1995, %v2278
  %v2509 = vmax.f32 %v1996, %v2277
  %v2510 = vmax.f32 %v1997, %v2281
  %v2511 = vmax.f32 %v1998, %v2283
  %v2512 = vmax.f32 %v1999, %v2285
  %v2513 = vmax.f32 %v2000, %v2284
  %v2514 = vmax.f32 %v2001, %v2288
  %v2515 = vmax.f32 %v2002, %v2290
  %v2516 = vmax.f32 %v2003, %v2292
  %v2517 = vmax.f32 %v2004, %v2291
  %v2518 = vmax.f32 %v2005, %v2295
  %v2519 = vmax.f32 %v2006, %v2297
  %v2520 = vmax.f32 %v2007, %v2299
  %v2521 = vmax.f32 %v2008, %v2298
  %v2522 = vmax.f32 %v2009, %v2302
  %v2523 = vmax.f32 %v2010, %v2304
  %v2524 = vmax.f32 %v2011, %v2306
  %v2525 = vmax.f32 %v2012, %v2305
  %v2526 = vmax.f32 %v2013, %v2309
  %v2527 = vmax.f32 %v2014, %v2311
  %v2528 = vmax.f32 %v2015, %v2313
  %v2529 = vmax.f32 %v2016, %v2312
  %s2530 = scalar_lea.vmem %s1, 32
  %v2531 = vld [vmem:[%s2530] sm:$0xff]
  %v2532 = vld [vmem:[%s2530 + $0x8] sm:$0xff]
  %v2533 = vld [vmem:[%s2530 + $0x10] sm:$0xff]
  %v2534 = vld [vmem:[%s2530 + $0x18] sm:$0x7]
  %v2535 = vld [vmem:[%s2530 + $0x20] sm:$0xff]
  %v2536 = vld [vmem:[%s2530 + $0x28] sm:$0xff]
  %v2537 = vld [vmem:[%s2530 + $0x30] sm:$0xff]
  %v2538 = vld [vmem:[%s2530 + $0x38] sm:$0x7]
  %v2539 = vld [vmem:[%s2530 + $0x40] sm:$0xff]
  %v2540 = vld [vmem:[%s2530 + $0x48] sm:$0xff]
  %v2541 = vld [vmem:[%s2530 + $0x50] sm:$0xff]
  %v2542 = vld [vmem:[%s2530 + $0x58] sm:$0x7]
  %v2543 = vld [vmem:[%s2530 + $0x60] sm:$0xff]
  %v2544 = vld [vmem:[%s2530 + $0x68] sm:$0xff]
  %v2545 = vld [vmem:[%s2530 + $0x70] sm:$0xff]
  %v2546 = vld [vmem:[%s2530 + $0x78] sm:$0x7]
  %v2547 = vld [vmem:[%s2530 + $0x80] sm:$0xff]
  %v2548 = vld [vmem:[%s2530 + $0x88] sm:$0xff]
  %v2549 = vld [vmem:[%s2530 + $0x90] sm:$0xff]
  %v2550 = vld [vmem:[%s2530 + $0x98] sm:$0x7]
  %v2551 = vld [vmem:[%s2530 + $0xa0] sm:$0xff]
  %v2552 = vld [vmem:[%s2530 + $0xa8] sm:$0xff]
  %v2553 = vld [vmem:[%s2530 + $0xb0] sm:$0xff]
  %v2554 = vld [vmem:[%s2530 + $0xb8] sm:$0x7]
  %v2555 = vld [vmem:[%s2530 + $0xc0] sm:$0xff]
  %v2556 = vld [vmem:[%s2530 + $0xc8] sm:$0xff]
  %v2557 = vld [vmem:[%s2530 + $0xd0] sm:$0xff]
  %v2558 = vld [vmem:[%s2530 + $0xd8] sm:$0x7]
  %v2559 = vld [vmem:[%s2530 + $0xe0] sm:$0xff]
  %v2560 = vld [vmem:[%s2530 + $0xe8] sm:$0xff]
  %v2561 = vld [vmem:[%s2530 + $0xf0] sm:$0xff]
  %v2562 = vld [vmem:[%s2530 + $0xf8] sm:$0x7]
  %v2563 = vld [vmem:[%s2530 + $0x100] sm:$0xff]
  %v2564 = vld [vmem:[%s2530 + $0x108] sm:$0xff]
  %v2565 = vld [vmem:[%s2530 + $0x110] sm:$0xff]
  %v2566 = vld [vmem:[%s2530 + $0x118] sm:$0x7]
  %v2567 = vld [vmem:[%s2530 + $0x120] sm:$0xff]
  %v2568 = vld [vmem:[%s2530 + $0x128] sm:$0xff]
  %v2569 = vld [vmem:[%s2530 + $0x130] sm:$0xff]
  %v2570 = vld [vmem:[%s2530 + $0x138] sm:$0x7]
  %v2571 = vld [vmem:[%s2530 + $0x140] sm:$0xff]
  %v2572 = vld [vmem:[%s2530 + $0x148] sm:$0xff]
  %v2573 = vld [vmem:[%s2530 + $0x150] sm:$0xff]
  %v2574 = vld [vmem:[%s2530 + $0x158] sm:$0x7]
  %v2575 = vld [vmem:[%s2530 + $0x160] sm:$0xff]
  %v2576 = vld [vmem:[%s2530 + $0x168] sm:$0xff]
  %v2577 = vld [vmem:[%s2530 + $0x170] sm:$0xff]
  %v2578 = vld [vmem:[%s2530 + $0x178] sm:$0x7]
  %v2579 = vld [vmem:[%s2530 + $0x180] sm:$0xff]
  %v2580 = vld [vmem:[%s2530 + $0x188] sm:$0xff]
  %v2581 = vld [vmem:[%s2530 + $0x190] sm:$0xff]
  %v2582 = vld [vmem:[%s2530 + $0x198] sm:$0x7]
  %v2583 = vld [vmem:[%s2530 + $0x1a0] sm:$0xff]
  %v2584 = vld [vmem:[%s2530 + $0x1a8] sm:$0xff]
  %v2585 = vld [vmem:[%s2530 + $0x1b0] sm:$0xff]
  %v2586 = vld [vmem:[%s2530 + $0x1b8] sm:$0x7]
  %v2587 = vld [vmem:[%s2530 + $0x1c0] sm:$0xff]
  %v2588 = vld [vmem:[%s2530 + $0x1c8] sm:$0xff]
  %v2589 = vld [vmem:[%s2530 + $0x1d0] sm:$0xff]
  %v2590 = vld [vmem:[%s2530 + $0x1d8] sm:$0x7]
  %v2591 = vld [vmem:[%s2530 + $0x1e0] sm:$0xff]
  %v2592 = vld [vmem:[%s2530 + $0x1e8] sm:$0xff]
  %v2593 = vld [vmem:[%s2530 + $0x1f0] sm:$0xff]
  %v2594 = vld [vmem:[%s2530 + $0x1f8] sm:$0x7]
  %v2595 = vld [vmem:[%s2530 + $0x200] sm:$0xff]
  %v2596 = vld [vmem:[%s2530 + $0x208] sm:$0xff]
  %v2597 = vld [vmem:[%s2530 + $0x210] sm:$0xff]
  %v2598 = vld [vmem:[%s2530 + $0x218] sm:$0x7]
  %v2599 = vld [vmem:[%s2530 + $0x220] sm:$0xff]
  %v2600 = vld [vmem:[%s2530 + $0x228] sm:$0xff]
  %v2601 = vld [vmem:[%s2530 + $0x230] sm:$0xff]
  %v2602 = vld [vmem:[%s2530 + $0x238] sm:$0x7]
  %v2603 = vld [vmem:[%s2530 + $0x240] sm:$0xff]
  %v2604 = vld [vmem:[%s2530 + $0x248] sm:$0xff]
  %v2605 = vld [vmem:[%s2530 + $0x250] sm:$0xff]
  %v2606 = vld [vmem:[%s2530 + $0x258] sm:$0x7]
  %v2607 = vld [vmem:[%s2530 + $0x260] sm:$0xff]
  %v2608 = vld [vmem:[%s2530 + $0x268] sm:$0xff]
  %v2609 = vld [vmem:[%s2530 + $0x270] sm:$0xff]
  %v2610 = vld [vmem:[%s2530 + $0x278] sm:$0x7]
  %v2611 = vld [vmem:[%s2530 + $0x280] sm:$0xff]
  %v2612 = vld [vmem:[%s2530 + $0x288] sm:$0xff]
  %v2613 = vld [vmem:[%s2530 + $0x290] sm:$0xff]
  %v2614 = vld [vmem:[%s2530 + $0x298] sm:$0x7]
  %v2615 = vld [vmem:[%s2530 + $0x2a0] sm:$0xff]
  %v2616 = vld [vmem:[%s2530 + $0x2a8] sm:$0xff]
  %v2617 = vld [vmem:[%s2530 + $0x2b0] sm:$0xff]
  %v2618 = vld [vmem:[%s2530 + $0x2b8] sm:$0x7]
  %v2619 = vld [vmem:[%s2530 + $0x2c0] sm:$0xff]
  %v2620 = vld [vmem:[%s2530 + $0x2c8] sm:$0xff]
  %v2621 = vld [vmem:[%s2530 + $0x2d0] sm:$0xff]
  %v2622 = vld [vmem:[%s2530 + $0x2d8] sm:$0x7]
  %v2623 = vld [vmem:[%s2530 + $0x2e0] sm:$0xff]
  %v2624 = vld [vmem:[%s2530 + $0x2e8] sm:$0xff]
  %v2625 = vld [vmem:[%s2530 + $0x2f0] sm:$0xff]
  %v2626 = vld [vmem:[%s2530 + $0x2f8] sm:$0x7]
  %v2627 = vld [vmem:[%s2530 + $0x300] sm:$0xff]
  %v2628 = vld [vmem:[%s2530 + $0x308] sm:$0xff]
  %v2629 = vld [vmem:[%s2530 + $0x310] sm:$0xff]
  %v2630 = vld [vmem:[%s2530 + $0x318] sm:$0x7]
  %v2631 = vld [vmem:[%s2530 + $0x320] sm:$0xff]
  %v2632 = vld [vmem:[%s2530 + $0x328] sm:$0xff]
  %v2633 = vld [vmem:[%s2530 + $0x330] sm:$0xff]
  %v2634 = vld [vmem:[%s2530 + $0x338] sm:$0x7]
  %v2635 = vld [vmem:[%s2530 + $0x340] sm:$0xff]
  %v2636 = vld [vmem:[%s2530 + $0x348] sm:$0xff]
  %v2637 = vld [vmem:[%s2530 + $0x350] sm:$0xff]
  %v2638 = vld [vmem:[%s2530 + $0x358] sm:$0x7]
  %v2639 = vmax.f32 %v2422, %v2531
  %v2640 = vmax.f32 %v2423, %v2532
  %v2641 = vmax.f32 %v2424, %v2533
  %v2642 = vmax.f32 %v2425, %v2534
  %v2643 = vmax.f32 %v2426, %v2535
  %v2644 = vmax.f32 %v2427, %v2536
  %v2645 = vmax.f32 %v2428, %v2537
  %v2646 = vmax.f32 %v2429, %v2538
  %v2647 = vmax.f32 %v2430, %v2539
  %v2648 = vmax.f32 %v2431, %v2540
  %v2649 = vmax.f32 %v2432, %v2541
  %v2650 = vmax.f32 %v2433, %v2542
  %v2651 = vmax.f32 %v2434, %v2543
  %v2652 = vmax.f32 %v2435, %v2544
  %v2653 = vmax.f32 %v2436, %v2545
  %v2654 = vmax.f32 %v2437, %v2546
  %v2655 = vmax.f32 %v2438, %v2547
  %v2656 = vmax.f32 %v2439, %v2548
  %v2657 = vmax.f32 %v2440, %v2549
  %v2658 = vmax.f32 %v2441, %v2550
  %v2659 = vmax.f32 %v2442, %v2551
  %v2660 = vmax.f32 %v2443, %v2552
  %v2661 = vmax.f32 %v2444, %v2553
  %v2662 = vmax.f32 %v2445, %v2554
  %v2663 = vmax.f32 %v2446, %v2555
  %v2664 = vmax.f32 %v2447, %v2556
  %v2665 = vmax.f32 %v2448, %v2557
  %v2666 = vmax.f32 %v2449, %v2558
  %v2667 = vmax.f32 %v2450, %v2559
  %v2668 = vmax.f32 %v2451, %v2560
  %v2669 = vmax.f32 %v2452, %v2561
  %v2670 = vmax.f32 %v2453, %v2562
  %v2671 = vmax.f32 %v2454, %v2563
  %v2672 = vmax.f32 %v2455, %v2564
  %v2673 = vmax.f32 %v2456, %v2565
  %v2674 = vmax.f32 %v2457, %v2566
  %v2675 = vmax.f32 %v2458, %v2567
  %v2676 = vmax.f32 %v2459, %v2568
  %v2677 = vmax.f32 %v2460, %v2569
  %v2678 = vmax.f32 %v2461, %v2570
  %v2679 = vmax.f32 %v2462, %v2571
  %v2680 = vmax.f32 %v2463, %v2572
  %v2681 = vmax.f32 %v2464, %v2573
  %v2682 = vmax.f32 %v2465, %v2574
  %v2683 = vmax.f32 %v2466, %v2575
  %v2684 = vmax.f32 %v2467, %v2576
  %v2685 = vmax.f32 %v2468, %v2577
  %v2686 = vmax.f32 %v2469, %v2578
  %v2687 = vmax.f32 %v2470, %v2579
  %v2688 = vmax.f32 %v2471, %v2580
  %v2689 = vmax.f32 %v2472, %v2581
  %v2690 = vmax.f32 %v2473, %v2582
  %v2691 = vmax.f32 %v2474, %v2583
  %v2692 = vmax.f32 %v2475, %v2584
  %v2693 = vmax.f32 %v2476, %v2585
  %v2694 = vmax.f32 %v2477, %v2586
  %v2695 = vmax.f32 %v2478, %v2587
  %v2696 = vmax.f32 %v2479, %v2588
  %v2697 = vmax.f32 %v2480, %v2589
  %v2698 = vmax.f32 %v2481, %v2590
  %v2699 = vmax.f32 %v2482, %v2591
  %v2700 = vmax.f32 %v2483, %v2592
  %v2701 = vmax.f32 %v2484, %v2593
  %v2702 = vmax.f32 %v2485, %v2594
  %v2703 = vmax.f32 %v2486, %v2595
  %v2704 = vmax.f32 %v2487, %v2596
  %v2705 = vmax.f32 %v2488, %v2597
  %v2706 = vmax.f32 %v2489, %v2598
  %v2707 = vmax.f32 %v2490, %v2599
  %v2708 = vmax.f32 %v2491, %v2600
  %v2709 = vmax.f32 %v2492, %v2601
  %v2710 = vmax.f32 %v2493, %v2602
  %v2711 = vmax.f32 %v2494, %v2603
  %v2712 = vmax.f32 %v2495, %v2604
  %v2713 = vmax.f32 %v2496, %v2605
  %v2714 = vmax.f32 %v2497, %v2606
  %v2715 = vmax.f32 %v2498, %v2607
  %v2716 = vmax.f32 %v2499, %v2608
  %v2717 = vmax.f32 %v2500, %v2609
  %v2718 = vmax.f32 %v2501, %v2610
  %v2719 = vmax.f32 %v2502, %v2611
  %v2720 = vmax.f32 %v2503, %v2612
  %v2721 = vmax.f32 %v2504, %v2613
  %v2722 = vmax.f32 %v2505, %v2614
  %v2723 = vmax.f32 %v2506, %v2615
  %v2724 = vmax.f32 %v2507, %v2616
  %v2725 = vmax.f32 %v2508, %v2617
  %v2726 = vmax.f32 %v2509, %v2618
  %v2727 = vmax.f32 %v2510, %v2619
  %v2728 = vmax.f32 %v2511, %v2620
  %v2729 = vmax.f32 %v2512, %v2621
  %v2730 = vmax.f32 %v2513, %v2622
  %v2731 = vmax.f32 %v2514, %v2623
  %v2732 = vmax.f32 %v2515, %v2624
  %v2733 = vmax.f32 %v2516, %v2625
  %v2734 = vmax.f32 %v2517, %v2626
  %v2735 = vmax.f32 %v2518, %v2627
  %v2736 = vmax.f32 %v2519, %v2628
  %v2737 = vmax.f32 %v2520, %v2629
  %v2738 = vmax.f32 %v2521, %v2630
  %v2739 = vmax.f32 %v2522, %v2631
  %v2740 = vmax.f32 %v2523, %v2632
  %v2741 = vmax.f32 %v2524, %v2633
  %v2742 = vmax.f32 %v2525, %v2634
  %v2743 = vmax.f32 %v2526, %v2635
  %v2744 = vmax.f32 %v2527, %v2636
  %v2745 = vmax.f32 %v2528, %v2637
  %v2746 = vmax.f32 %v2529, %v2638
  %vm2747 = vcmask 785408
  %2748 = vst.msk [vmem:[%s4] sm:$0xff] %vm2747, %v2639
  %2749 = vst.msk [vmem:[%s4 + $0x8] sm:$0xff] %vm2747, %v2640
  %2750 = vst.msk [vmem:[%s4 + $0x10] sm:$0xff] %vm2747, %v2641
  %vm2751 = vcmask 780288
  %2752 = vst.msk [vmem:[%s4 + $0x18] sm:$0x7] %vm2751, %v2642
  %2753 = vst.msk [vmem:[%s4 + $0x20] sm:$0xff] %vm2747, %v2643
  %2754 = vst.msk [vmem:[%s4 + $0x28] sm:$0xff] %vm2747, %v2644
  %2755 = vst.msk [vmem:[%s4 + $0x30] sm:$0xff] %vm2747, %v2645
  %2756 = vst.msk [vmem:[%s4 + $0x38] sm:$0x7] %vm2751, %v2646
  %2757 = vst.msk [vmem:[%s4 + $0x40] sm:$0xff] %vm2747, %v2647
  %2758 = vst.msk [vmem:[%s4 + $0x48] sm:$0xff] %vm2747, %v2648
  %2759 = vst.msk [vmem:[%s4 + $0x50] sm:$0xff] %vm2747, %v2649
  %2760 = vst.msk [vmem:[%s4 + $0x58] sm:$0x7] %vm2751, %v2650
  %2761 = vst.msk [vmem:[%s4 + $0x60] sm:$0xff] %vm2747, %v2651
  %2762 = vst.msk [vmem:[%s4 + $0x68] sm:$0xff] %vm2747, %v2652
  %2763 = vst.msk [vmem:[%s4 + $0x70] sm:$0xff] %vm2747, %v2653
  %2764 = vst.msk [vmem:[%s4 + $0x78] sm:$0x7] %vm2751, %v2654
  %2765 = vst.msk [vmem:[%s4 + $0x80] sm:$0xff] %vm2747, %v2655
  %2766 = vst.msk [vmem:[%s4 + $0x88] sm:$0xff] %vm2747, %v2656
  %2767 = vst.msk [vmem:[%s4 + $0x90] sm:$0xff] %vm2747, %v2657
  %2768 = vst.msk [vmem:[%s4 + $0x98] sm:$0x7] %vm2751, %v2658
  %2769 = vst.msk [vmem:[%s4 + $0xa0] sm:$0xff] %vm2747, %v2659
  %2770 = vst.msk [vmem:[%s4 + $0xa8] sm:$0xff] %vm2747, %v2660
  %2771 = vst.msk [vmem:[%s4 + $0xb0] sm:$0xff] %vm2747, %v2661
  %2772 = vst.msk [vmem:[%s4 + $0xb8] sm:$0x7] %vm2751, %v2662
  %2773 = vst.msk [vmem:[%s4 + $0xc0] sm:$0xff] %vm2747, %v2663
  %2774 = vst.msk [vmem:[%s4 + $0xc8] sm:$0xff] %vm2747, %v2664
  %2775 = vst.msk [vmem:[%s4 + $0xd0] sm:$0xff] %vm2747, %v2665
  %2776 = vst.msk [vmem:[%s4 + $0xd8] sm:$0x7] %vm2751, %v2666
  %2777 = vst.msk [vmem:[%s4 + $0xe0] sm:$0xff] %vm2747, %v2667
  %2778 = vst.msk [vmem:[%s4 + $0xe8] sm:$0xff] %vm2747, %v2668
  %2779 = vst.msk [vmem:[%s4 + $0xf0] sm:$0xff] %vm2747, %v2669
  %2780 = vst.msk [vmem:[%s4 + $0xf8] sm:$0x7] %vm2751, %v2670
  %2781 = vst.msk [vmem:[%s4 + $0x100] sm:$0xff] %vm2747, %v2671
  %2782 = vst.msk [vmem:[%s4 + $0x108] sm:$0xff] %vm2747, %v2672
  %2783 = vst.msk [vmem:[%s4 + $0x110] sm:$0xff] %vm2747, %v2673
  %2784 = vst.msk [vmem:[%s4 + $0x118] sm:$0x7] %vm2751, %v2674
  %2785 = vst.msk [vmem:[%s4 + $0x120] sm:$0xff] %vm2747, %v2675
  %2786 = vst.msk [vmem:[%s4 + $0x128] sm:$0xff] %vm2747, %v2676
  %2787 = vst.msk [vmem:[%s4 + $0x130] sm:$0xff] %vm2747, %v2677
  %2788 = vst.msk [vmem:[%s4 + $0x138] sm:$0x7] %vm2751, %v2678
  %2789 = vst.msk [vmem:[%s4 + $0x140] sm:$0xff] %vm2747, %v2679
  %2790 = vst.msk [vmem:[%s4 + $0x148] sm:$0xff] %vm2747, %v2680
  %2791 = vst.msk [vmem:[%s4 + $0x150] sm:$0xff] %vm2747, %v2681
  %2792 = vst.msk [vmem:[%s4 + $0x158] sm:$0x7] %vm2751, %v2682
  %2793 = vst.msk [vmem:[%s4 + $0x160] sm:$0xff] %vm2747, %v2683
  %2794 = vst.msk [vmem:[%s4 + $0x168] sm:$0xff] %vm2747, %v2684
  %2795 = vst.msk [vmem:[%s4 + $0x170] sm:$0xff] %vm2747, %v2685
  %2796 = vst.msk [vmem:[%s4 + $0x178] sm:$0x7] %vm2751, %v2686
  %2797 = vst.msk [vmem:[%s4 + $0x180] sm:$0xff] %vm2747, %v2687
  %2798 = vst.msk [vmem:[%s4 + $0x188] sm:$0xff] %vm2747, %v2688
  %2799 = vst.msk [vmem:[%s4 + $0x190] sm:$0xff] %vm2747, %v2689
  %2800 = vst.msk [vmem:[%s4 + $0x198] sm:$0x7] %vm2751, %v2690
  %2801 = vst.msk [vmem:[%s4 + $0x1a0] sm:$0xff] %vm2747, %v2691
  %2802 = vst.msk [vmem:[%s4 + $0x1a8] sm:$0xff] %vm2747, %v2692
  %2803 = vst.msk [vmem:[%s4 + $0x1b0] sm:$0xff] %vm2747, %v2693
  %2804 = vst.msk [vmem:[%s4 + $0x1b8] sm:$0x7] %vm2751, %v2694
  %2805 = vst.msk [vmem:[%s4 + $0x1c0] sm:$0xff] %vm2747, %v2695
  %2806 = vst.msk [vmem:[%s4 + $0x1c8] sm:$0xff] %vm2747, %v2696
  %2807 = vst.msk [vmem:[%s4 + $0x1d0] sm:$0xff] %vm2747, %v2697
  %2808 = vst.msk [vmem:[%s4 + $0x1d8] sm:$0x7] %vm2751, %v2698
  %2809 = vst.msk [vmem:[%s4 + $0x1e0] sm:$0xff] %vm2747, %v2699
  %2810 = vst.msk [vmem:[%s4 + $0x1e8] sm:$0xff] %vm2747, %v2700
  %2811 = vst.msk [vmem:[%s4 + $0x1f0] sm:$0xff] %vm2747, %v2701
  %2812 = vst.msk [vmem:[%s4 + $0x1f8] sm:$0x7] %vm2751, %v2702
  %2813 = vst.msk [vmem:[%s4 + $0x200] sm:$0xff] %vm2747, %v2703
  %2814 = vst.msk [vmem:[%s4 + $0x208] sm:$0xff] %vm2747, %v2704
  %2815 = vst.msk [vmem:[%s4 + $0x210] sm:$0xff] %vm2747, %v2705
  %2816 = vst.msk [vmem:[%s4 + $0x218] sm:$0x7] %vm2751, %v2706
  %2817 = vst.msk [vmem:[%s4 + $0x220] sm:$0xff] %vm2747, %v2707
  %2818 = vst.msk [vmem:[%s4 + $0x228] sm:$0xff] %vm2747, %v2708
  %2819 = vst.msk [vmem:[%s4 + $0x230] sm:$0xff] %vm2747, %v2709
  %2820 = vst.msk [vmem:[%s4 + $0x238] sm:$0x7] %vm2751, %v2710
  %2821 = vst.msk [vmem:[%s4 + $0x240] sm:$0xff] %vm2747, %v2711
  %2822 = vst.msk [vmem:[%s4 + $0x248] sm:$0xff] %vm2747, %v2712
  %2823 = vst.msk [vmem:[%s4 + $0x250] sm:$0xff] %vm2747, %v2713
  %2824 = vst.msk [vmem:[%s4 + $0x258] sm:$0x7] %vm2751, %v2714
  %2825 = vst.msk [vmem:[%s4 + $0x260] sm:$0xff] %vm2747, %v2715
  %2826 = vst.msk [vmem:[%s4 + $0x268] sm:$0xff] %vm2747, %v2716
  %2827 = vst.msk [vmem:[%s4 + $0x270] sm:$0xff] %vm2747, %v2717
  %2828 = vst.msk [vmem:[%s4 + $0x278] sm:$0x7] %vm2751, %v2718
  %2829 = vst.msk [vmem:[%s4 + $0x280] sm:$0xff] %vm2747, %v2719
  %2830 = vst.msk [vmem:[%s4 + $0x288] sm:$0xff] %vm2747, %v2720
  %2831 = vst.msk [vmem:[%s4 + $0x290] sm:$0xff] %vm2747, %v2721
  %2832 = vst.msk [vmem:[%s4 + $0x298] sm:$0x7] %vm2751, %v2722
  %2833 = vst.msk [vmem:[%s4 + $0x2a0] sm:$0xff] %vm2747, %v2723
  %2834 = vst.msk [vmem:[%s4 + $0x2a8] sm:$0xff] %vm2747, %v2724
  %2835 = vst.msk [vmem:[%s4 + $0x2b0] sm:$0xff] %vm2747, %v2725
  %2836 = vst.msk [vmem:[%s4 + $0x2b8] sm:$0x7] %vm2751, %v2726
  %2837 = vst.msk [vmem:[%s4 + $0x2c0] sm:$0xff] %vm2747, %v2727
  %2838 = vst.msk [vmem:[%s4 + $0x2c8] sm:$0xff] %vm2747, %v2728
  %2839 = vst.msk [vmem:[%s4 + $0x2d0] sm:$0xff] %vm2747, %v2729
  %2840 = vst.msk [vmem:[%s4 + $0x2d8] sm:$0x7] %vm2751, %v2730
  %2841 = vst.msk [vmem:[%s4 + $0x2e0] sm:$0xff] %vm2747, %v2731
  %2842 = vst.msk [vmem:[%s4 + $0x2e8] sm:$0xff] %vm2747, %v2732
  %2843 = vst.msk [vmem:[%s4 + $0x2f0] sm:$0xff] %vm2747, %v2733
  %2844 = vst.msk [vmem:[%s4 + $0x2f8] sm:$0x7] %vm2751, %v2734
  %2845 = vst.msk [vmem:[%s4 + $0x300] sm:$0xff] %vm2747, %v2735
  %2846 = vst.msk [vmem:[%s4 + $0x308] sm:$0xff] %vm2747, %v2736
  %2847 = vst.msk [vmem:[%s4 + $0x310] sm:$0xff] %vm2747, %v2737
  %2848 = vst.msk [vmem:[%s4 + $0x318] sm:$0x7] %vm2751, %v2738
  %2849 = vst.msk [vmem:[%s4 + $0x320] sm:$0xff] %vm2747, %v2739
  %2850 = vst.msk [vmem:[%s4 + $0x328] sm:$0xff] %vm2747, %v2740
  %2851 = vst.msk [vmem:[%s4 + $0x330] sm:$0xff] %vm2747, %v2741
  %2852 = vst.msk [vmem:[%s4 + $0x338] sm:$0x7] %vm2751, %v2742
  %2853 = vst.msk [vmem:[%s4 + $0x340] sm:$0xff] %vm2747, %v2743
  %2854 = vst.msk [vmem:[%s4 + $0x348] sm:$0xff] %vm2747, %v2744
  %2855 = vst.msk [vmem:[%s4 + $0x350] sm:$0xff] %vm2747, %v2745
  %2856 = vst.msk [vmem:[%s4 + $0x358] sm:$0x7] %vm2751, %v2746
  // Predicated region
  $region18: #{maxpool2d.1} parent=0 // pred_check
    _
  $region19: #{maxpool2d.1} parent=0 // pred_check_branch
    %2858 = sbr.rel (0) target = $region21
  $region20: #{maxpool2d.1} parent=0 // pred_region
    _
  $region21: #{maxpool2d.1} parent=0 // pred_fallthru
    _
  // Predicated region
  $region22: #{maxpool2d.1} parent=0 // pred_check
    _
  $region23: #{maxpool2d.1} parent=0 // pred_check_branch
    %2860 = sbr.rel (0) target = $region25
  $region24: #{maxpool2d.1} parent=0 // pred_region
    _
  $region25: #{maxpool2d.1} parent=0 // pred_fallthru
    _

</llo_original>
